<compile_context>
chip_gen: v6e
topology: v6e:2x2x1
jax: 0.10.0
libtpu: 0.0.40
codegen_flags: <defaults>
</compile_context>

<pallas_src>
import jax
import jax.numpy as jnp
from jax.experimental import pallas as pl
from jax.experimental.pallas import tpu as pltpu


# ----------------------------------------------------------------------------
# Fused Pallas kernel (factory closes over the static problem sizes)
# ----------------------------------------------------------------------------
def _make_fused_kernel(num_layers, B, T, I, H):
    f32 = jnp.float32
    bf16 = jnp.bfloat16
    G4 = 4 * H

    def kernel(*refs):
        # refs layout:
        #   [0] x2      (T*B, I)  bf16, rows ordered t*B + b (time-major)
        #   [1] w_ih0   (I, 4H)   bf16   layer-0 input projection (gate-packed)
        #   [2] b0      (1, 4H)   f32    b_ih0 + b_hh0
        #   then per layer l:
        #     l < L-1 : w_fused_l (H, 8H) bf16 = [W_hh_l | W_ih_{l+1}],
        #               b_{l+1}   (1, 4H) f32
        #     l = L-1 : w_hh_last (H, 4H) bf16
        #   then: w_fc (H, I) bf16, b_fc (1, I) f32, out (B, I) f32
        x2_ref = refs[0]
        wih0_ref = refs[1]
        b0_ref = refs[2]
        idx = 3
        layer_refs = []
        for l in range(num_layers):
            if l + 1 < num_layers:
                layer_refs.append((refs[idx], refs[idx + 1]))
                idx += 2
            else:
                layer_refs.append((refs[idx], None))
                idx += 1
        wfc_ref = refs[idx]
        bfc_ref = refs[idx + 1]
        out_ref = refs[idx + 2]

        # Static lane mask: gate g (lanes [2H, 3H)) gets tanh, others sigmoid.
        lane = jax.lax.broadcasted_iota(jnp.int32, (B, G4), 1)
        g_mask = jnp.logical_and(lane >= 2 * H, lane < 3 * H)

        # ---- Layer-0 input projection hoisted out of the recurrence --------
        # Single lane-dense (T*B, I) @ (I, 4H) bf16 matmul + bias; rows are
        # time-major, so the per-step pre-activation is a contiguous 2-row
        # sublane slice (one-time, off the serial chain).
        p0 = (jnp.dot(x2_ref[...], wih0_ref[...], preferred_element_type=f32)
              + b0_ref[...])                                   # (T*B, 4H) f32
        px = [jax.lax.slice(p0, (t * B, 0), ((t + 1) * B, G4)) for t in range(T)]

        h = jnp.zeros((B, H), f32)
        for layer in range(num_layers):
            w_ref, bn_ref = layer_refs[layer]
            has_next = bn_ref is not None
            W = w_ref[...]                              # hoisted: (H,8H)/(H,4H) bf16
            b_next = bn_ref[...] if has_next else None  # (1, 4H) f32

            c = jnp.zeros((B, H), f32)
            rec = jnp.zeros((B, G4), f32)               # packed h_{t-1} @ W_hh
            nxt = []
            # Static unroll over T: ONE MXU push per step on the serial chain.
            for t in range(T):
                pre = px[t] + rec                       # (B, 4H) f32
                sig = jax.nn.sigmoid(pre)               # 1 EUP pass, full vreg
                tng = jnp.tanh(pre)                     # 1 EUP pass, full vreg
                gates = jnp.where(g_mask, tng, sig)     # cheap VPU select
                i_g = gates[:, 0 * H:1 * H]
                f_g = gates[:, 1 * H:2 * H]
                g_g = gates[:, 2 * H:3 * H]
                o_g = gates[:, 3 * H:4 * H]
                c = f_g * c + i_g * g_g
                h = o_g * jnp.tanh(c)
                if (t + 1 < T) or has_next:
                    # Single fused matmul on h_t: recurrent pre-activation for
                    # step t+1 (lanes [:4H]) and, if present, the next layer's
                    # input projection for step t (lanes [4H:]).
                    fused = jnp.dot(h.astype(bf16), W,
                                    preferred_element_type=f32)
                    rec = fused[:, :G4]
                    if has_next:
                        nxt.append(fused[:, G4:] + b_next)
            px = nxt

        # ---- FC head on the final hidden state ------------------------------
        # dropout(p=0.2) in eval mode -> identity.
        out = (jnp.dot(h.astype(bf16), wfc_ref[...], preferred_element_type=f32)
               + bfc_ref[...])
        out_ref[...] = out.astype(out_ref.dtype)

    return kernel


# ----------------------------------------------------------------------------
# Wrapper: packs PyTorch-style params into the kernel layout and calls Pallas
# ----------------------------------------------------------------------------
def lstm_anomaly_detector_forward(x, params):
    """x: (B, T, input_size) -> (B, input_size). Single fused pallas_call."""
    B, T, I = x.shape
    lstm = params["lstm"]
    L = len(lstm)
    H = lstm[0]["w_hh"].shape[1]
    bf16 = jnp.bfloat16

    # --- one-time packing (tiny XLA ops outside the kernel) -----------------
    # PyTorch weight_ih/hh are (4H, in) with gate rows i|f|g|o; transposing
    # gives the lane-packed (in, 4H) layout the kernel wants.
    x2 = jnp.transpose(x, (1, 0, 2)).reshape(T * B, I).astype(bf16)  # rows t*B+b
    args = [x2,
            jnp.transpose(lstm[0]["w_ih"]).astype(bf16),                  # (I, 4H)
            (lstm[0]["b_ih"] + lstm[0]["b_hh"]).reshape(1, 4 * H)]        # (1, 4H)
    for l in range(L):
        whh_t = jnp.transpose(lstm[l]["w_hh"]).astype(bf16)               # (H, 4H)
        if l + 1 < L:
            wih_next_t = jnp.transpose(lstm[l + 1]["w_ih"]).astype(bf16)  # (H, 4H)
            args.append(jnp.concatenate([whh_t, wih_next_t], axis=1))     # (H, 8H)
            args.append((lstm[l + 1]["b_ih"]
                         + lstm[l + 1]["b_hh"]).reshape(1, 4 * H))
        else:
            args.append(whh_t)
    args.append(jnp.transpose(params["fc"]["w"]).astype(bf16))            # (H, I)
    args.append(params["fc"]["b"].reshape(1, I))                          # (1, I)

    vmem = pl.BlockSpec(memory_space=pltpu.MemorySpace.VMEM)
    return pl.pallas_call(
        _make_fused_kernel(L, B, T, I, H),
        out_shape=jax.ShapeDtypeStruct((B, I), jnp.float32),
        in_specs=[vmem] * len(args),
        out_specs=vmem,
    )(*args)


def init_params(key, input_size, hidden_size, num_layers):
    """PyTorch-style init: uniform(-1/sqrt(H), 1/sqrt(H)), gate order i,f,g,o."""
    H = hidden_size
    k = 1.0 / (H ** 0.5)
    params = {"lstm": [], "fc": {}}
    for layer in range(num_layers):
        in_sz = input_size if layer == 0 else H
        key, k1, k2, k3, k4 = jax.random.split(key, 5)
        params["lstm"].append({
            "w_ih": jax.random.uniform(k1, (4 * H, in_sz), jnp.float32, -k, k),
            "w_hh": jax.random.uniform(k2, (4 * H, H), jnp.float32, -k, k),
            "b_ih": jax.random.uniform(k3, (4 * H,), jnp.float32, -k, k),
            "b_hh": jax.random.uniform(k4, (4 * H,), jnp.float32, -k, k),
        })
    key, k5, k6 = jax.random.split(key, 3)
    params["fc"]["w"] = jax.random.uniform(k5, (input_size, H), jnp.float32, -k, k)
    params["fc"]["b"] = jax.random.uniform(k6, (input_size,), jnp.float32, -k, k)
    return params


# ----------------------------------------------------------------------------
# Pure-JAX f32 reference (sanity check of kernel semantics)
# ----------------------------------------------------------------------------
def _reference_forward(x, params):
    B, T, _ = x.shape
    seq = x.astype(jnp.float32)                      # (B, T, in)
    for lp in params["lstm"]:
        wih, whh = lp["w_ih"], lp["w_hh"]            # (4H, in), (4H, H)
        b = lp["b_ih"] + lp["b_hh"]                  # (4H,)
        H = whh.shape[1]
        h = jnp.zeros((B, H), jnp.float32)
        c = jnp.zeros((B, H), jnp.float32)
        outs = []
        for t in range(T):
            gates = seq[:, t, :] @ wih.T + h @ whh.T + b      # (B, 4H)
            i_g = jax.nn.sigmoid(gates[:, 0 * H:1 * H])
            f_g = jax.nn.sigmoid(gates[:, 1 * H:2 * H])
            g_g = jnp.tanh(gates[:, 2 * H:3 * H])
            o_g = jax.nn.sigmoid(gates[:, 3 * H:4 * H])
            c = f_g * c + i_g * g_g
            h = o_g * jnp.tanh(c)
            outs.append(h)
        seq = jnp.stack(outs, axis=1)                # (B, T, H)
    return seq[:, -1, :] @ params["fc"]["w"].T + params["fc"]["b"]


if __name__ == "__main__":
    INPUT_SIZE = 4
    HIDDEN_SIZE = 32
    NUM_LAYERS = 2
    SEQ_LEN = 8
    BATCH = 2

    key = jax.random.PRNGKey(0)
    key, pkey, xkey = jax.random.split(key, 3)
    params = init_params(pkey, INPUT_SIZE, HIDDEN_SIZE, NUM_LAYERS)
    x = jax.random.normal(xkey, (BATCH, SEQ_LEN, INPUT_SIZE), jnp.float32)

    fwd = jax.jit(lstm_anomaly_detector_forward)
    out = jax.block_until_ready(fwd(x, params))

    ref = jax.block_until_ready(_reference_forward(x, params))
    assert out.shape == (BATCH, INPUT_SIZE), out.shape
    # bf16 MXU operands with f32 accumulation: looser tolerance vs f32 reference.
    assert jnp.allclose(out, ref, atol=2e-2, rtol=2e-2), (out, ref)

    print("KERNEL_OK")
</pallas_src>

<mosaic_0001>
module attributes {stable_mosaic.version = 11 : i64} {
  func.func @kernel(%arg0: memref<16x4xbf16, #tpu.memory_space<vmem>>, %arg1: memref<4x128xbf16, #tpu.memory_space<vmem>>, %arg2: memref<1x128xf32, #tpu.memory_space<vmem>>, %arg3: memref<32x256xbf16, #tpu.memory_space<vmem>>, %arg4: memref<1x128xf32, #tpu.memory_space<vmem>>, %arg5: memref<32x128xbf16, #tpu.memory_space<vmem>>, %arg6: memref<32x4xbf16, #tpu.memory_space<vmem>>, %arg7: memref<1x4xf32, #tpu.memory_space<vmem>>, %arg8: memref<2x4xf32, #tpu.memory_space<vmem>>) attributes {dimension_semantics = [], scalar_prefetch = 0 : i64, scratch_operands = 0 : i64, tpu.core_type = #tpu.core_type<tc>} {
    %0 = tpu.iota {dimensions = array<i32: 1>} : vector<2x128xi32>
    %c64_i32 = arith.constant 64 : i32
    %1 = vector.broadcast %c64_i32 : i32 to vector<2x128xi32>
    %2 = arith.cmpi sge, %0, %1 : vector<2x128xi32>
    %c96_i32 = arith.constant 96 : i32
    %3 = vector.broadcast %c96_i32 : i32 to vector<2x128xi32>
    %4 = arith.cmpi slt, %0, %3 : vector<2x128xi32>
    %5 = arith.andi %2, %4 : vector<2x128xi1>
    %c0 = arith.constant 0 : index
    %c0_0 = arith.constant 0 : index
    %6 = vector.load %arg0[%c0, %c0_0] : memref<16x4xbf16, #tpu.memory_space<vmem>>, vector<16x4xbf16>
    %c0_1 = arith.constant 0 : index
    %c0_2 = arith.constant 0 : index
    %7 = vector.load %arg1[%c0_1, %c0_2] : memref<4x128xbf16, #tpu.memory_space<vmem>>, vector<4x128xbf16>
    %cst = arith.constant dense<0.000000e+00> : vector<16x128xf32>
    %8 = tpu.matmul %6, %7, %cst {dimension_numbers = #tpu.dot_dimension_numbers<[1], [0], [0], [1], [0, 0, 1, 1], [], []>} : vector<16x4xbf16>, vector<4x128xbf16>, vector<16x128xf32> -> vector<16x128xf32>
    %c0_3 = arith.constant 0 : index
    %c0_4 = arith.constant 0 : index
    %9 = vector.load %arg2[%c0_3, %c0_4] : memref<1x128xf32, #tpu.memory_space<vmem>>, vector<1x128xf32>
    %10 = vector.broadcast %9 : vector<1x128xf32> to vector<16x128xf32>
    %11 = arith.addf %8, %10 : vector<16x128xf32>
    %12 = vector.extract_strided_slice %11 {offsets = [0, 0], sizes = [2, 128], strides = [1, 1]} : vector<16x128xf32> to vector<2x128xf32>
    %13 = vector.extract_strided_slice %11 {offsets = [2, 0], sizes = [2, 128], strides = [1, 1]} : vector<16x128xf32> to vector<2x128xf32>
    %14 = vector.extract_strided_slice %11 {offsets = [4, 0], sizes = [2, 128], strides = [1, 1]} : vector<16x128xf32> to vector<2x128xf32>
    %15 = vector.extract_strided_slice %11 {offsets = [6, 0], sizes = [2, 128], strides = [1, 1]} : vector<16x128xf32> to vector<2x128xf32>
    %16 = vector.extract_strided_slice %11 {offsets = [8, 0], sizes = [2, 128], strides = [1, 1]} : vector<16x128xf32> to vector<2x128xf32>
    %17 = vector.extract_strided_slice %11 {offsets = [10, 0], sizes = [2, 128], strides = [1, 1]} : vector<16x128xf32> to vector<2x128xf32>
    %18 = vector.extract_strided_slice %11 {offsets = [12, 0], sizes = [2, 128], strides = [1, 1]} : vector<16x128xf32> to vector<2x128xf32>
    %19 = vector.extract_strided_slice %11 {offsets = [14, 0], sizes = [2, 128], strides = [1, 1]} : vector<16x128xf32> to vector<2x128xf32>
    %c0_5 = arith.constant 0 : index
    %c0_6 = arith.constant 0 : index
    %20 = vector.load %arg3[%c0_5, %c0_6] : memref<32x256xbf16, #tpu.memory_space<vmem>>, vector<32x256xbf16>
    %c0_7 = arith.constant 0 : index
    %c0_8 = arith.constant 0 : index
    %21 = vector.load %arg4[%c0_7, %c0_8] : memref<1x128xf32, #tpu.memory_space<vmem>>, vector<1x128xf32>
    %cst_9 = arith.constant 0.000000e+00 : f32
    %22 = vector.broadcast %cst_9 : f32 to vector<2x32xf32>
    %cst_10 = arith.constant 0.000000e+00 : f32
    %23 = vector.broadcast %cst_10 : f32 to vector<2x128xf32>
    %24 = arith.addf %12, %23 : vector<2x128xf32>
    %25 = arith.negf %24 : vector<2x128xf32>
    %26 = math.exp %25 : vector<2x128xf32>
    %cst_11 = arith.constant 1.000000e+00 : f32
    %27 = vector.broadcast %cst_11 : f32 to vector<2x128xf32>
    %28 = arith.addf %27, %26 : vector<2x128xf32>
    %29 = arith.divf %27, %28 : vector<2x128xf32>
    %30 = math.tanh %24 : vector<2x128xf32>
    %31 = arith.select %5, %30, %29 : vector<2x128xi1>, vector<2x128xf32>
    %32 = vector.extract_strided_slice %31 {offsets = [0, 0], sizes = [2, 32], strides = [1, 1]} : vector<2x128xf32> to vector<2x32xf32>
    %33 = vector.extract_strided_slice %31 {offsets = [0, 32], sizes = [2, 32], strides = [1, 1]} : vector<2x128xf32> to vector<2x32xf32>
    %34 = vector.extract_strided_slice %31 {offsets = [0, 64], sizes = [2, 32], strides = [1, 1]} : vector<2x128xf32> to vector<2x32xf32>
    %35 = vector.extract_strided_slice %31 {offsets = [0, 96], sizes = [2, 32], strides = [1, 1]} : vector<2x128xf32> to vector<2x32xf32>
    %36 = arith.mulf %33, %22 : vector<2x32xf32>
    %37 = arith.mulf %32, %34 : vector<2x32xf32>
    %38 = arith.addf %36, %37 : vector<2x32xf32>
    %39 = math.tanh %38 : vector<2x32xf32>
    %40 = arith.mulf %35, %39 : vector<2x32xf32>
    %41 = arith.truncf %40 : vector<2x32xf32> to vector<2x32xbf16>
    %cst_12 = arith.constant dense<0.000000e+00> : vector<2x256xf32>
    %42 = tpu.matmul %41, %20, %cst_12 {dimension_numbers = #tpu.dot_dimension_numbers<[1], [0], [0], [1], [0, 0, 1, 1], [], []>} : vector<2x32xbf16>, vector<32x256xbf16>, vector<2x256xf32> -> vector<2x256xf32>
    %43 = vector.extract_strided_slice %42 {offsets = [0, 0], sizes = [2, 128], strides = [1, 1]} : vector<2x256xf32> to vector<2x128xf32>
    %44 = vector.extract_strided_slice %42 {offsets = [0, 128], sizes = [2, 128], strides = [1, 1]} : vector<2x256xf32> to vector<2x128xf32>
    %45 = vector.broadcast %21 : vector<1x128xf32> to vector<2x128xf32>
    %46 = arith.addf %44, %45 : vector<2x128xf32>
    %47 = arith.addf %13, %43 : vector<2x128xf32>
    %48 = arith.negf %47 : vector<2x128xf32>
    %49 = math.exp %48 : vector<2x128xf32>
    %cst_13 = arith.constant 1.000000e+00 : f32
    %50 = vector.broadcast %cst_13 : f32 to vector<2x128xf32>
    %51 = arith.addf %50, %49 : vector<2x128xf32>
    %52 = arith.divf %50, %51 : vector<2x128xf32>
    %53 = math.tanh %47 : vector<2x128xf32>
    %54 = arith.select %5, %53, %52 : vector<2x128xi1>, vector<2x128xf32>
    %55 = vector.extract_strided_slice %54 {offsets = [0, 0], sizes = [2, 32], strides = [1, 1]} : vector<2x128xf32> to vector<2x32xf32>
    %56 = vector.extract_strided_slice %54 {offsets = [0, 32], sizes = [2, 32], strides = [1, 1]} : vector<2x128xf32> to vector<2x32xf32>
    %57 = vector.extract_strided_slice %54 {offsets = [0, 64], sizes = [2, 32], strides = [1, 1]} : vector<2x128xf32> to vector<2x32xf32>
    %58 = vector.extract_strided_slice %54 {offsets = [0, 96], sizes = [2, 32], strides = [1, 1]} : vector<2x128xf32> to vector<2x32xf32>
    %59 = arith.mulf %56, %38 : vector<2x32xf32>
    %60 = arith.mulf %55, %57 : vector<2x32xf32>
    %61 = arith.addf %59, %60 : vector<2x32xf32>
    %62 = math.tanh %61 : vector<2x32xf32>
    %63 = arith.mulf %58, %62 : vector<2x32xf32>
    %64 = arith.truncf %63 : vector<2x32xf32> to vector<2x32xbf16>
    %cst_14 = arith.constant dense<0.000000e+00> : vector<2x256xf32>
    %65 = tpu.matmul %64, %20, %cst_14 {dimension_numbers = #tpu.dot_dimension_numbers<[1], [0], [0], [1], [0, 0, 1, 1], [], []>} : vector<2x32xbf16>, vector<32x256xbf16>, vector<2x256xf32> -> vector<2x256xf32>
    %66 = vector.extract_strided_slice %65 {offsets = [0, 0], sizes = [2, 128], strides = [1, 1]} : vector<2x256xf32> to vector<2x128xf32>
    %67 = vector.extract_strided_slice %65 {offsets = [0, 128], sizes = [2, 128], strides = [1, 1]} : vector<2x256xf32> to vector<2x128xf32>
    %68 = vector.broadcast %21 : vector<1x128xf32> to vector<2x128xf32>
    %69 = arith.addf %67, %68 : vector<2x128xf32>
    %70 = arith.addf %14, %66 : vector<2x128xf32>
    %71 = arith.negf %70 : vector<2x128xf32>
    %72 = math.exp %71 : vector<2x128xf32>
    %cst_15 = arith.constant 1.000000e+00 : f32
    %73 = vector.broadcast %cst_15 : f32 to vector<2x128xf32>
    %74 = arith.addf %73, %72 : vector<2x128xf32>
    %75 = arith.divf %73, %74 : vector<2x128xf32>
    %76 = math.tanh %70 : vector<2x128xf32>
    %77 = arith.select %5, %76, %75 : vector<2x128xi1>, vector<2x128xf32>
    %78 = vector.extract_strided_slice %77 {offsets = [0, 0], sizes = [2, 32], strides = [1, 1]} : vector<2x128xf32> to vector<2x32xf32>
    %79 = vector.extract_strided_slice %77 {offsets = [0, 32], sizes = [2, 32], strides = [1, 1]} : vector<2x128xf32> to vector<2x32xf32>
    %80 = vector.extract_strided_slice %77 {offsets = [0, 64], sizes = [2, 32], strides = [1, 1]} : vector<2x128xf32> to vector<2x32xf32>
    %81 = vector.extract_strided_slice %77 {offsets = [0, 96], sizes = [2, 32], strides = [1, 1]} : vector<2x128xf32> to vector<2x32xf32>
    %82 = arith.mulf %79, %61 : vector<2x32xf32>
    %83 = arith.mulf %78, %80 : vector<2x32xf32>
    %84 = arith.addf %82, %83 : vector<2x32xf32>
    %85 = math.tanh %84 : vector<2x32xf32>
    %86 = arith.mulf %81, %85 : vector<2x32xf32>
    %87 = arith.truncf %86 : vector<2x32xf32> to vector<2x32xbf16>
    %cst_16 = arith.constant dense<0.000000e+00> : vector<2x256xf32>
    %88 = tpu.matmul %87, %20, %cst_16 {dimension_numbers = #tpu.dot_dimension_numbers<[1], [0], [0], [1], [0, 0, 1, 1], [], []>} : vector<2x32xbf16>, vector<32x256xbf16>, vector<2x256xf32> -> vector<2x256xf32>
    %89 = vector.extract_strided_slice %88 {offsets = [0, 0], sizes = [2, 128], strides = [1, 1]} : vector<2x256xf32> to vector<2x128xf32>
    %90 = vector.extract_strided_slice %88 {offsets = [0, 128], sizes = [2, 128], strides = [1, 1]} : vector<2x256xf32> to vector<2x128xf32>
    %91 = vector.broadcast %21 : vector<1x128xf32> to vector<2x128xf32>
    %92 = arith.addf %90, %91 : vector<2x128xf32>
    %93 = arith.addf %15, %89 : vector<2x128xf32>
    %94 = arith.negf %93 : vector<2x128xf32>
    %95 = math.exp %94 : vector<2x128xf32>
    %cst_17 = arith.constant 1.000000e+00 : f32
    %96 = vector.broadcast %cst_17 : f32 to vector<2x128xf32>
    %97 = arith.addf %96, %95 : vector<2x128xf32>
    %98 = arith.divf %96, %97 : vector<2x128xf32>
    %99 = math.tanh %93 : vector<2x128xf32>
    %100 = arith.select %5, %99, %98 : vector<2x128xi1>, vector<2x128xf32>
    %101 = vector.extract_strided_slice %100 {offsets = [0, 0], sizes = [2, 32], strides = [1, 1]} : vector<2x128xf32> to vector<2x32xf32>
    %102 = vector.extract_strided_slice %100 {offsets = [0, 32], sizes = [2, 32], strides = [1, 1]} : vector<2x128xf32> to vector<2x32xf32>
    %103 = vector.extract_strided_slice %100 {offsets = [0, 64], sizes = [2, 32], strides = [1, 1]} : vector<2x128xf32> to vector<2x32xf32>
    %104 = vector.extract_strided_slice %100 {offsets = [0, 96], sizes = [2, 32], strides = [1, 1]} : vector<2x128xf32> to vector<2x32xf32>
    %105 = arith.mulf %102, %84 : vector<2x32xf32>
    %106 = arith.mulf %101, %103 : vector<2x32xf32>
    %107 = arith.addf %105, %106 : vector<2x32xf32>
    %108 = math.tanh %107 : vector<2x32xf32>
    %109 = arith.mulf %104, %108 : vector<2x32xf32>
    %110 = arith.truncf %109 : vector<2x32xf32> to vector<2x32xbf16>
    %cst_18 = arith.constant dense<0.000000e+00> : vector<2x256xf32>
    %111 = tpu.matmul %110, %20, %cst_18 {dimension_numbers = #tpu.dot_dimension_numbers<[1], [0], [0], [1], [0, 0, 1, 1], [], []>} : vector<2x32xbf16>, vector<32x256xbf16>, vector<2x256xf32> -> vector<2x256xf32>
    %112 = vector.extract_strided_slice %111 {offsets = [0, 0], sizes = [2, 128], strides = [1, 1]} : vector<2x256xf32> to vector<2x128xf32>
    %113 = vector.extract_strided_slice %111 {offsets = [0, 128], sizes = [2, 128], strides = [1, 1]} : vector<2x256xf32> to vector<2x128xf32>
    %114 = vector.broadcast %21 : vector<1x128xf32> to vector<2x128xf32>
    %115 = arith.addf %113, %114 : vector<2x128xf32>
    %116 = arith.addf %16, %112 : vector<2x128xf32>
    %117 = arith.negf %116 : vector<2x128xf32>
    %118 = math.exp %117 : vector<2x128xf32>
    %cst_19 = arith.constant 1.000000e+00 : f32
    %119 = vector.broadcast %cst_19 : f32 to vector<2x128xf32>
    %120 = arith.addf %119, %118 : vector<2x128xf32>
    %121 = arith.divf %119, %120 : vector<2x128xf32>
    %122 = math.tanh %116 : vector<2x128xf32>
    %123 = arith.select %5, %122, %121 : vector<2x128xi1>, vector<2x128xf32>
    %124 = vector.extract_strided_slice %123 {offsets = [0, 0], sizes = [2, 32], strides = [1, 1]} : vector<2x128xf32> to vector<2x32xf32>
    %125 = vector.extract_strided_slice %123 {offsets = [0, 32], sizes = [2, 32], strides = [1, 1]} : vector<2x128xf32> to vector<2x32xf32>
    %126 = vector.extract_strided_slice %123 {offsets = [0, 64], sizes = [2, 32], strides = [1, 1]} : vector<2x128xf32> to vector<2x32xf32>
    %127 = vector.extract_strided_slice %123 {offsets = [0, 96], sizes = [2, 32], strides = [1, 1]} : vector<2x128xf32> to vector<2x32xf32>
    %128 = arith.mulf %125, %107 : vector<2x32xf32>
    %129 = arith.mulf %124, %126 : vector<2x32xf32>
    %130 = arith.addf %128, %129 : vector<2x32xf32>
    %131 = math.tanh %130 : vector<2x32xf32>
    %132 = arith.mulf %127, %131 : vector<2x32xf32>
    %133 = arith.truncf %132 : vector<2x32xf32> to vector<2x32xbf16>
    %cst_20 = arith.constant dense<0.000000e+00> : vector<2x256xf32>
    %134 = tpu.matmul %133, %20, %cst_20 {dimension_numbers = #tpu.dot_dimension_numbers<[1], [0], [0], [1], [0, 0, 1, 1], [], []>} : vector<2x32xbf16>, vector<32x256xbf16>, vector<2x256xf32> -> vector<2x256xf32>
    %135 = vector.extract_strided_slice %134 {offsets = [0, 0], sizes = [2, 128], strides = [1, 1]} : vector<2x256xf32> to vector<2x128xf32>
    %136 = vector.extract_strided_slice %134 {offsets = [0, 128], sizes = [2, 128], strides = [1, 1]} : vector<2x256xf32> to vector<2x128xf32>
    %137 = vector.broadcast %21 : vector<1x128xf32> to vector<2x128xf32>
    %138 = arith.addf %136, %137 : vector<2x128xf32>
    %139 = arith.addf %17, %135 : vector<2x128xf32>
    %140 = arith.negf %139 : vector<2x128xf32>
    %141 = math.exp %140 : vector<2x128xf32>
    %cst_21 = arith.constant 1.000000e+00 : f32
    %142 = vector.broadcast %cst_21 : f32 to vector<2x128xf32>
    %143 = arith.addf %142, %141 : vector<2x128xf32>
    %144 = arith.divf %142, %143 : vector<2x128xf32>
    %145 = math.tanh %139 : vector<2x128xf32>
    %146 = arith.select %5, %145, %144 : vector<2x128xi1>, vector<2x128xf32>
    %147 = vector.extract_strided_slice %146 {offsets = [0, 0], sizes = [2, 32], strides = [1, 1]} : vector<2x128xf32> to vector<2x32xf32>
    %148 = vector.extract_strided_slice %146 {offsets = [0, 32], sizes = [2, 32], strides = [1, 1]} : vector<2x128xf32> to vector<2x32xf32>
    %149 = vector.extract_strided_slice %146 {offsets = [0, 64], sizes = [2, 32], strides = [1, 1]} : vector<2x128xf32> to vector<2x32xf32>
    %150 = vector.extract_strided_slice %146 {offsets = [0, 96], sizes = [2, 32], strides = [1, 1]} : vector<2x128xf32> to vector<2x32xf32>
    %151 = arith.mulf %148, %130 : vector<2x32xf32>
    %152 = arith.mulf %147, %149 : vector<2x32xf32>
    %153 = arith.addf %151, %152 : vector<2x32xf32>
    %154 = math.tanh %153 : vector<2x32xf32>
    %155 = arith.mulf %150, %154 : vector<2x32xf32>
    %156 = arith.truncf %155 : vector<2x32xf32> to vector<2x32xbf16>
    %cst_22 = arith.constant dense<0.000000e+00> : vector<2x256xf32>
    %157 = tpu.matmul %156, %20, %cst_22 {dimension_numbers = #tpu.dot_dimension_numbers<[1], [0], [0], [1], [0, 0, 1, 1], [], []>} : vector<2x32xbf16>, vector<32x256xbf16>, vector<2x256xf32> -> vector<2x256xf32>
    %158 = vector.extract_strided_slice %157 {offsets = [0, 0], sizes = [2, 128], strides = [1, 1]} : vector<2x256xf32> to vector<2x128xf32>
    %159 = vector.extract_strided_slice %157 {offsets = [0, 128], sizes = [2, 128], strides = [1, 1]} : vector<2x256xf32> to vector<2x128xf32>
    %160 = vector.broadcast %21 : vector<1x128xf32> to vector<2x128xf32>
    %161 = arith.addf %159, %160 : vector<2x128xf32>
    %162 = arith.addf %18, %158 : vector<2x128xf32>
    %163 = arith.negf %162 : vector<2x128xf32>
    %164 = math.exp %163 : vector<2x128xf32>
    %cst_23 = arith.constant 1.000000e+00 : f32
    %165 = vector.broadcast %cst_23 : f32 to vector<2x128xf32>
    %166 = arith.addf %165, %164 : vector<2x128xf32>
    %167 = arith.divf %165, %166 : vector<2x128xf32>
    %168 = math.tanh %162 : vector<2x128xf32>
    %169 = arith.select %5, %168, %167 : vector<2x128xi1>, vector<2x128xf32>
    %170 = vector.extract_strided_slice %169 {offsets = [0, 0], sizes = [2, 32], strides = [1, 1]} : vector<2x128xf32> to vector<2x32xf32>
    %171 = vector.extract_strided_slice %169 {offsets = [0, 32], sizes = [2, 32], strides = [1, 1]} : vector<2x128xf32> to vector<2x32xf32>
    %172 = vector.extract_strided_slice %169 {offsets = [0, 64], sizes = [2, 32], strides = [1, 1]} : vector<2x128xf32> to vector<2x32xf32>
    %173 = vector.extract_strided_slice %169 {offsets = [0, 96], sizes = [2, 32], strides = [1, 1]} : vector<2x128xf32> to vector<2x32xf32>
    %174 = arith.mulf %171, %153 : vector<2x32xf32>
    %175 = arith.mulf %170, %172 : vector<2x32xf32>
    %176 = arith.addf %174, %175 : vector<2x32xf32>
    %177 = math.tanh %176 : vector<2x32xf32>
    %178 = arith.mulf %173, %177 : vector<2x32xf32>
    %179 = arith.truncf %178 : vector<2x32xf32> to vector<2x32xbf16>
    %cst_24 = arith.constant dense<0.000000e+00> : vector<2x256xf32>
    %180 = tpu.matmul %179, %20, %cst_24 {dimension_numbers = #tpu.dot_dimension_numbers<[1], [0], [0], [1], [0, 0, 1, 1], [], []>} : vector<2x32xbf16>, vector<32x256xbf16>, vector<2x256xf32> -> vector<2x256xf32>
    %181 = vector.extract_strided_slice %180 {offsets = [0, 0], sizes = [2, 128], strides = [1, 1]} : vector<2x256xf32> to vector<2x128xf32>
    %182 = vector.extract_strided_slice %180 {offsets = [0, 128], sizes = [2, 128], strides = [1, 1]} : vector<2x256xf32> to vector<2x128xf32>
    %183 = vector.broadcast %21 : vector<1x128xf32> to vector<2x128xf32>
    %184 = arith.addf %182, %183 : vector<2x128xf32>
    %185 = arith.addf %19, %181 : vector<2x128xf32>
    %186 = arith.negf %185 : vector<2x128xf32>
    %187 = math.exp %186 : vector<2x128xf32>
    %cst_25 = arith.constant 1.000000e+00 : f32
    %188 = vector.broadcast %cst_25 : f32 to vector<2x128xf32>
    %189 = arith.addf %188, %187 : vector<2x128xf32>
    %190 = arith.divf %188, %189 : vector<2x128xf32>
    %191 = math.tanh %185 : vector<2x128xf32>
    %192 = arith.select %5, %191, %190 : vector<2x128xi1>, vector<2x128xf32>
    %193 = vector.extract_strided_slice %192 {offsets = [0, 0], sizes = [2, 32], strides = [1, 1]} : vector<2x128xf32> to vector<2x32xf32>
    %194 = vector.extract_strided_slice %192 {offsets = [0, 32], sizes = [2, 32], strides = [1, 1]} : vector<2x128xf32> to vector<2x32xf32>
    %195 = vector.extract_strided_slice %192 {offsets = [0, 64], sizes = [2, 32], strides = [1, 1]} : vector<2x128xf32> to vector<2x32xf32>
    %196 = vector.extract_strided_slice %192 {offsets = [0, 96], sizes = [2, 32], strides = [1, 1]} : vector<2x128xf32> to vector<2x32xf32>
    %197 = arith.mulf %194, %176 : vector<2x32xf32>
    %198 = arith.mulf %193, %195 : vector<2x32xf32>
    %199 = arith.addf %197, %198 : vector<2x32xf32>
    %200 = math.tanh %199 : vector<2x32xf32>
    %201 = arith.mulf %196, %200 : vector<2x32xf32>
    %202 = arith.truncf %201 : vector<2x32xf32> to vector<2x32xbf16>
    %cst_26 = arith.constant dense<0.000000e+00> : vector<2x256xf32>
    %203 = tpu.matmul %202, %20, %cst_26 {dimension_numbers = #tpu.dot_dimension_numbers<[1], [0], [0], [1], [0, 0, 1, 1], [], []>} : vector<2x32xbf16>, vector<32x256xbf16>, vector<2x256xf32> -> vector<2x256xf32>
    %204 = vector.extract_strided_slice %203 {offsets = [0, 128], sizes = [2, 128], strides = [1, 1]} : vector<2x256xf32> to vector<2x128xf32>
    %205 = vector.broadcast %21 : vector<1x128xf32> to vector<2x128xf32>
    %206 = arith.addf %204, %205 : vector<2x128xf32>
    %c0_27 = arith.constant 0 : index
    %c0_28 = arith.constant 0 : index
    %207 = vector.load %arg5[%c0_27, %c0_28] : memref<32x128xbf16, #tpu.memory_space<vmem>>, vector<32x128xbf16>
    %cst_29 = arith.constant 0.000000e+00 : f32
    %208 = vector.broadcast %cst_29 : f32 to vector<2x32xf32>
    %cst_30 = arith.constant 0.000000e+00 : f32
    %209 = vector.broadcast %cst_30 : f32 to vector<2x128xf32>
    %210 = arith.addf %46, %209 : vector<2x128xf32>
    %211 = arith.negf %210 : vector<2x128xf32>
    %212 = math.exp %211 : vector<2x128xf32>
    %cst_31 = arith.constant 1.000000e+00 : f32
    %213 = vector.broadcast %cst_31 : f32 to vector<2x128xf32>
    %214 = arith.addf %213, %212 : vector<2x128xf32>
    %215 = arith.divf %213, %214 : vector<2x128xf32>
    %216 = math.tanh %210 : vector<2x128xf32>
    %217 = arith.select %5, %216, %215 : vector<2x128xi1>, vector<2x128xf32>
    %218 = vector.extract_strided_slice %217 {offsets = [0, 0], sizes = [2, 32], strides = [1, 1]} : vector<2x128xf32> to vector<2x32xf32>
    %219 = vector.extract_strided_slice %217 {offsets = [0, 32], sizes = [2, 32], strides = [1, 1]} : vector<2x128xf32> to vector<2x32xf32>
    %220 = vector.extract_strided_slice %217 {offsets = [0, 64], sizes = [2, 32], strides = [1, 1]} : vector<2x128xf32> to vector<2x32xf32>
    %221 = vector.extract_strided_slice %217 {offsets = [0, 96], sizes = [2, 32], strides = [1, 1]} : vector<2x128xf32> to vector<2x32xf32>
    %222 = arith.mulf %219, %208 : vector<2x32xf32>
    %223 = arith.mulf %218, %220 : vector<2x32xf32>
    %224 = arith.addf %222, %223 : vector<2x32xf32>
    %225 = math.tanh %224 : vector<2x32xf32>
    %226 = arith.mulf %221, %225 : vector<2x32xf32>
    %227 = arith.truncf %226 : vector<2x32xf32> to vector<2x32xbf16>
    %cst_32 = arith.constant dense<0.000000e+00> : vector<2x128xf32>
    %228 = tpu.matmul %227, %207, %cst_32 {dimension_numbers = #tpu.dot_dimension_numbers<[1], [0], [0], [1], [0, 0, 1, 1], [], []>} : vector<2x32xbf16>, vector<32x128xbf16>, vector<2x128xf32> -> vector<2x128xf32>
    %229 = arith.addf %69, %228 : vector<2x128xf32>
    %230 = arith.negf %229 : vector<2x128xf32>
    %231 = math.exp %230 : vector<2x128xf32>
    %cst_33 = arith.constant 1.000000e+00 : f32
    %232 = vector.broadcast %cst_33 : f32 to vector<2x128xf32>
    %233 = arith.addf %232, %231 : vector<2x128xf32>
    %234 = arith.divf %232, %233 : vector<2x128xf32>
    %235 = math.tanh %229 : vector<2x128xf32>
    %236 = arith.select %5, %235, %234 : vector<2x128xi1>, vector<2x128xf32>
    %237 = vector.extract_strided_slice %236 {offsets = [0, 0], sizes = [2, 32], strides = [1, 1]} : vector<2x128xf32> to vector<2x32xf32>
    %238 = vector.extract_strided_slice %236 {offsets = [0, 32], sizes = [2, 32], strides = [1, 1]} : vector<2x128xf32> to vector<2x32xf32>
    %239 = vector.extract_strided_slice %236 {offsets = [0, 64], sizes = [2, 32], strides = [1, 1]} : vector<2x128xf32> to vector<2x32xf32>
    %240 = vector.extract_strided_slice %236 {offsets = [0, 96], sizes = [2, 32], strides = [1, 1]} : vector<2x128xf32> to vector<2x32xf32>
    %241 = arith.mulf %238, %224 : vector<2x32xf32>
    %242 = arith.mulf %237, %239 : vector<2x32xf32>
    %243 = arith.addf %241, %242 : vector<2x32xf32>
    %244 = math.tanh %243 : vector<2x32xf32>
    %245 = arith.mulf %240, %244 : vector<2x32xf32>
    %246 = arith.truncf %245 : vector<2x32xf32> to vector<2x32xbf16>
    %cst_34 = arith.constant dense<0.000000e+00> : vector<2x128xf32>
    %247 = tpu.matmul %246, %207, %cst_34 {dimension_numbers = #tpu.dot_dimension_numbers<[1], [0], [0], [1], [0, 0, 1, 1], [], []>} : vector<2x32xbf16>, vector<32x128xbf16>, vector<2x128xf32> -> vector<2x128xf32>
    %248 = arith.addf %92, %247 : vector<2x128xf32>
    %249 = arith.negf %248 : vector<2x128xf32>
    %250 = math.exp %249 : vector<2x128xf32>
    %cst_35 = arith.constant 1.000000e+00 : f32
    %251 = vector.broadcast %cst_35 : f32 to vector<2x128xf32>
    %252 = arith.addf %251, %250 : vector<2x128xf32>
    %253 = arith.divf %251, %252 : vector<2x128xf32>
    %254 = math.tanh %248 : vector<2x128xf32>
    %255 = arith.select %5, %254, %253 : vector<2x128xi1>, vector<2x128xf32>
    %256 = vector.extract_strided_slice %255 {offsets = [0, 0], sizes = [2, 32], strides = [1, 1]} : vector<2x128xf32> to vector<2x32xf32>
    %257 = vector.extract_strided_slice %255 {offsets = [0, 32], sizes = [2, 32], strides = [1, 1]} : vector<2x128xf32> to vector<2x32xf32>
    %258 = vector.extract_strided_slice %255 {offsets = [0, 64], sizes = [2, 32], strides = [1, 1]} : vector<2x128xf32> to vector<2x32xf32>
    %259 = vector.extract_strided_slice %255 {offsets = [0, 96], sizes = [2, 32], strides = [1, 1]} : vector<2x128xf32> to vector<2x32xf32>
    %260 = arith.mulf %257, %243 : vector<2x32xf32>
    %261 = arith.mulf %256, %258 : vector<2x32xf32>
    %262 = arith.addf %260, %261 : vector<2x32xf32>
    %263 = math.tanh %262 : vector<2x32xf32>
    %264 = arith.mulf %259, %263 : vector<2x32xf32>
    %265 = arith.truncf %264 : vector<2x32xf32> to vector<2x32xbf16>
    %cst_36 = arith.constant dense<0.000000e+00> : vector<2x128xf32>
    %266 = tpu.matmul %265, %207, %cst_36 {dimension_numbers = #tpu.dot_dimension_numbers<[1], [0], [0], [1], [0, 0, 1, 1], [], []>} : vector<2x32xbf16>, vector<32x128xbf16>, vector<2x128xf32> -> vector<2x128xf32>
    %267 = arith.addf %115, %266 : vector<2x128xf32>
    %268 = arith.negf %267 : vector<2x128xf32>
    %269 = math.exp %268 : vector<2x128xf32>
    %cst_37 = arith.constant 1.000000e+00 : f32
    %270 = vector.broadcast %cst_37 : f32 to vector<2x128xf32>
    %271 = arith.addf %270, %269 : vector<2x128xf32>
    %272 = arith.divf %270, %271 : vector<2x128xf32>
    %273 = math.tanh %267 : vector<2x128xf32>
    %274 = arith.select %5, %273, %272 : vector<2x128xi1>, vector<2x128xf32>
    %275 = vector.extract_strided_slice %274 {offsets = [0, 0], sizes = [2, 32], strides = [1, 1]} : vector<2x128xf32> to vector<2x32xf32>
    %276 = vector.extract_strided_slice %274 {offsets = [0, 32], sizes = [2, 32], strides = [1, 1]} : vector<2x128xf32> to vector<2x32xf32>
    %277 = vector.extract_strided_slice %274 {offsets = [0, 64], sizes = [2, 32], strides = [1, 1]} : vector<2x128xf32> to vector<2x32xf32>
    %278 = vector.extract_strided_slice %274 {offsets = [0, 96], sizes = [2, 32], strides = [1, 1]} : vector<2x128xf32> to vector<2x32xf32>
    %279 = arith.mulf %276, %262 : vector<2x32xf32>
    %280 = arith.mulf %275, %277 : vector<2x32xf32>
    %281 = arith.addf %279, %280 : vector<2x32xf32>
    %282 = math.tanh %281 : vector<2x32xf32>
    %283 = arith.mulf %278, %282 : vector<2x32xf32>
    %284 = arith.truncf %283 : vector<2x32xf32> to vector<2x32xbf16>
    %cst_38 = arith.constant dense<0.000000e+00> : vector<2x128xf32>
    %285 = tpu.matmul %284, %207, %cst_38 {dimension_numbers = #tpu.dot_dimension_numbers<[1], [0], [0], [1], [0, 0, 1, 1], [], []>} : vector<2x32xbf16>, vector<32x128xbf16>, vector<2x128xf32> -> vector<2x128xf32>
    %286 = arith.addf %138, %285 : vector<2x128xf32>
    %287 = arith.negf %286 : vector<2x128xf32>
    %288 = math.exp %287 : vector<2x128xf32>
    %cst_39 = arith.constant 1.000000e+00 : f32
    %289 = vector.broadcast %cst_39 : f32 to vector<2x128xf32>
    %290 = arith.addf %289, %288 : vector<2x128xf32>
    %291 = arith.divf %289, %290 : vector<2x128xf32>
    %292 = math.tanh %286 : vector<2x128xf32>
    %293 = arith.select %5, %292, %291 : vector<2x128xi1>, vector<2x128xf32>
    %294 = vector.extract_strided_slice %293 {offsets = [0, 0], sizes = [2, 32], strides = [1, 1]} : vector<2x128xf32> to vector<2x32xf32>
    %295 = vector.extract_strided_slice %293 {offsets = [0, 32], sizes = [2, 32], strides = [1, 1]} : vector<2x128xf32> to vector<2x32xf32>
    %296 = vector.extract_strided_slice %293 {offsets = [0, 64], sizes = [2, 32], strides = [1, 1]} : vector<2x128xf32> to vector<2x32xf32>
    %297 = vector.extract_strided_slice %293 {offsets = [0, 96], sizes = [2, 32], strides = [1, 1]} : vector<2x128xf32> to vector<2x32xf32>
    %298 = arith.mulf %295, %281 : vector<2x32xf32>
    %299 = arith.mulf %294, %296 : vector<2x32xf32>
    %300 = arith.addf %298, %299 : vector<2x32xf32>
    %301 = math.tanh %300 : vector<2x32xf32>
    %302 = arith.mulf %297, %301 : vector<2x32xf32>
    %303 = arith.truncf %302 : vector<2x32xf32> to vector<2x32xbf16>
    %cst_40 = arith.constant dense<0.000000e+00> : vector<2x128xf32>
    %304 = tpu.matmul %303, %207, %cst_40 {dimension_numbers = #tpu.dot_dimension_numbers<[1], [0], [0], [1], [0, 0, 1, 1], [], []>} : vector<2x32xbf16>, vector<32x128xbf16>, vector<2x128xf32> -> vector<2x128xf32>
    %305 = arith.addf %161, %304 : vector<2x128xf32>
    %306 = arith.negf %305 : vector<2x128xf32>
    %307 = math.exp %306 : vector<2x128xf32>
    %cst_41 = arith.constant 1.000000e+00 : f32
    %308 = vector.broadcast %cst_41 : f32 to vector<2x128xf32>
    %309 = arith.addf %308, %307 : vector<2x128xf32>
    %310 = arith.divf %308, %309 : vector<2x128xf32>
    %311 = math.tanh %305 : vector<2x128xf32>
    %312 = arith.select %5, %311, %310 : vector<2x128xi1>, vector<2x128xf32>
    %313 = vector.extract_strided_slice %312 {offsets = [0, 0], sizes = [2, 32], strides = [1, 1]} : vector<2x128xf32> to vector<2x32xf32>
    %314 = vector.extract_strided_slice %312 {offsets = [0, 32], sizes = [2, 32], strides = [1, 1]} : vector<2x128xf32> to vector<2x32xf32>
    %315 = vector.extract_strided_slice %312 {offsets = [0, 64], sizes = [2, 32], strides = [1, 1]} : vector<2x128xf32> to vector<2x32xf32>
    %316 = vector.extract_strided_slice %312 {offsets = [0, 96], sizes = [2, 32], strides = [1, 1]} : vector<2x128xf32> to vector<2x32xf32>
    %317 = arith.mulf %314, %300 : vector<2x32xf32>
    %318 = arith.mulf %313, %315 : vector<2x32xf32>
    %319 = arith.addf %317, %318 : vector<2x32xf32>
    %320 = math.tanh %319 : vector<2x32xf32>
    %321 = arith.mulf %316, %320 : vector<2x32xf32>
    %322 = arith.truncf %321 : vector<2x32xf32> to vector<2x32xbf16>
    %cst_42 = arith.constant dense<0.000000e+00> : vector<2x128xf32>
    %323 = tpu.matmul %322, %207, %cst_42 {dimension_numbers = #tpu.dot_dimension_numbers<[1], [0], [0], [1], [0, 0, 1, 1], [], []>} : vector<2x32xbf16>, vector<32x128xbf16>, vector<2x128xf32> -> vector<2x128xf32>
    %324 = arith.addf %184, %323 : vector<2x128xf32>
    %325 = arith.negf %324 : vector<2x128xf32>
    %326 = math.exp %325 : vector<2x128xf32>
    %cst_43 = arith.constant 1.000000e+00 : f32
    %327 = vector.broadcast %cst_43 : f32 to vector<2x128xf32>
    %328 = arith.addf %327, %326 : vector<2x128xf32>
    %329 = arith.divf %327, %328 : vector<2x128xf32>
    %330 = math.tanh %324 : vector<2x128xf32>
    %331 = arith.select %5, %330, %329 : vector<2x128xi1>, vector<2x128xf32>
    %332 = vector.extract_strided_slice %331 {offsets = [0, 0], sizes = [2, 32], strides = [1, 1]} : vector<2x128xf32> to vector<2x32xf32>
    %333 = vector.extract_strided_slice %331 {offsets = [0, 32], sizes = [2, 32], strides = [1, 1]} : vector<2x128xf32> to vector<2x32xf32>
    %334 = vector.extract_strided_slice %331 {offsets = [0, 64], sizes = [2, 32], strides = [1, 1]} : vector<2x128xf32> to vector<2x32xf32>
    %335 = vector.extract_strided_slice %331 {offsets = [0, 96], sizes = [2, 32], strides = [1, 1]} : vector<2x128xf32> to vector<2x32xf32>
    %336 = arith.mulf %333, %319 : vector<2x32xf32>
    %337 = arith.mulf %332, %334 : vector<2x32xf32>
    %338 = arith.addf %336, %337 : vector<2x32xf32>
    %339 = math.tanh %338 : vector<2x32xf32>
    %340 = arith.mulf %335, %339 : vector<2x32xf32>
    %341 = arith.truncf %340 : vector<2x32xf32> to vector<2x32xbf16>
    %cst_44 = arith.constant dense<0.000000e+00> : vector<2x128xf32>
    %342 = tpu.matmul %341, %207, %cst_44 {dimension_numbers = #tpu.dot_dimension_numbers<[1], [0], [0], [1], [0, 0, 1, 1], [], []>} : vector<2x32xbf16>, vector<32x128xbf16>, vector<2x128xf32> -> vector<2x128xf32>
    %343 = arith.addf %206, %342 : vector<2x128xf32>
    %344 = arith.negf %343 : vector<2x128xf32>
    %345 = math.exp %344 : vector<2x128xf32>
    %cst_45 = arith.constant 1.000000e+00 : f32
    %346 = vector.broadcast %cst_45 : f32 to vector<2x128xf32>
    %347 = arith.addf %346, %345 : vector<2x128xf32>
    %348 = arith.divf %346, %347 : vector<2x128xf32>
    %349 = math.tanh %343 : vector<2x128xf32>
    %350 = arith.select %5, %349, %348 : vector<2x128xi1>, vector<2x128xf32>
    %351 = vector.extract_strided_slice %350 {offsets = [0, 0], sizes = [2, 32], strides = [1, 1]} : vector<2x128xf32> to vector<2x32xf32>
    %352 = vector.extract_strided_slice %350 {offsets = [0, 32], sizes = [2, 32], strides = [1, 1]} : vector<2x128xf32> to vector<2x32xf32>
    %353 = vector.extract_strided_slice %350 {offsets = [0, 64], sizes = [2, 32], strides = [1, 1]} : vector<2x128xf32> to vector<2x32xf32>
    %354 = vector.extract_strided_slice %350 {offsets = [0, 96], sizes = [2, 32], strides = [1, 1]} : vector<2x128xf32> to vector<2x32xf32>
    %355 = arith.mulf %352, %338 : vector<2x32xf32>
    %356 = arith.mulf %351, %353 : vector<2x32xf32>
    %357 = arith.addf %355, %356 : vector<2x32xf32>
    %358 = math.tanh %357 : vector<2x32xf32>
    %359 = arith.mulf %354, %358 : vector<2x32xf32>
    %360 = arith.truncf %359 : vector<2x32xf32> to vector<2x32xbf16>
    %c0_46 = arith.constant 0 : index
    %c0_47 = arith.constant 0 : index
    %361 = vector.load %arg6[%c0_46, %c0_47] : memref<32x4xbf16, #tpu.memory_space<vmem>>, vector<32x4xbf16>
    %cst_48 = arith.constant dense<0.000000e+00> : vector<2x4xf32>
    %362 = tpu.matmul %360, %361, %cst_48 {dimension_numbers = #tpu.dot_dimension_numbers<[1], [0], [0], [1], [0, 0, 1, 1], [], []>} : vector<2x32xbf16>, vector<32x4xbf16>, vector<2x4xf32> -> vector<2x4xf32>
    %c0_49 = arith.constant 0 : index
    %c0_50 = arith.constant 0 : index
    %363 = vector.load %arg7[%c0_49, %c0_50] : memref<1x4xf32, #tpu.memory_space<vmem>>, vector<1x4xf32>
    %364 = vector.broadcast %363 : vector<1x4xf32> to vector<2x4xf32>
    %365 = arith.addf %362, %364 : vector<2x4xf32>
    %c0_51 = arith.constant 0 : index
    %c0_52 = arith.constant 0 : index
    %366 = vector.load %arg8[%c0_51, %c0_52] : memref<2x4xf32, #tpu.memory_space<vmem>>, vector<2x4xf32>
    tpu.vector_store %arg8[%c0_51, %c0_52], %365 {strides = array<i32>} : memref<2x4xf32, #tpu.memory_space<vmem>>, vector<2x4xf32>,
    return
  }
}

</mosaic_0001>

<llo_original>
// kernel: lstm_anomaly_detector_forward.1
$region0: #{lstm_anomaly_detector_forward.1}
  #allocation0 [shape = 'u32[]', space=smem, size = 0x4, offset = 0x4, fixed_abs, tag = 'smem constant byte address 0x4 - core index']
  #allocation1 [shape = 'u32[144,128]{1,0:T(1,128)}', space=vmem, size = 0x12000, scoped, tag = 'internal scratch']
  %s0 = inlined_call_operand.vmem [shape: bf16[16,4], index: 0, kind: input, shape index: {}]
  %s1 = inlined_call_operand.vmem [shape: bf16[4,128], index: 1, kind: input, shape index: {}]
  %s2 = inlined_call_operand.vmem [shape: f32[1,128], index: 2, kind: input, shape index: {}]
  %s3 = inlined_call_operand.vmem [shape: bf16[32,256], index: 3, kind: input, shape index: {}]
  %s4 = inlined_call_operand.vmem [shape: f32[1,128], index: 4, kind: input, shape index: {}]
  %s5 = inlined_call_operand.vmem [shape: bf16[32,128], index: 5, kind: input, shape index: {}]
  %s6 = inlined_call_operand.vmem [shape: bf16[32,4], index: 6, kind: input, shape index: {}]
  %s7 = inlined_call_operand.vmem [shape: f32[1,4], index: 7, kind: input, shape index: {}]
  %s8 = inlined_call_operand.hbm [shape: f32[2,4], index: 8, kind: output, shape index: {}]
  %s9 = sld [smem:[#allocation0]]
  $region42: #{lstm_anomaly_detector_forward.1} parent=0
    _
  %s11 = ssub.s32 1, %s9
  %s12 = scalar_select 0, %s11, %s9
  $region1: #{lstm_anomaly_detector_forward.1} parent=0
    #allocation2 [shape = 'u8[1024]{0}', space=vmem, size = 0x400, scoped, tag = 'output window, operand 0, single buffered']
    #allocation3 [shape = 's32[1]{0}', space=sflag, size = 0x4, scoped, tag = 'scoped memory for lstm_anomaly_detector_forward.1']
    %13 = vsyncpa [#allocation3], 0
    // Predicated region
    $region2: #{lstm_anomaly_detector_forward.1} parent=1 // pred_check
      _
    $region3: #{lstm_anomaly_detector_forward.1} parent=1 // pred_check_branch
      %15 = sbr.rel (0) target = $region5
    $region4: #{lstm_anomaly_detector_forward.1} parent=1 // pred_region
      _
    $region5: #{lstm_anomaly_detector_forward.1} parent=1 // pred_fallthru
      _
    // Predicated region
    $region6: #{lstm_anomaly_detector_forward.1} parent=1 // pred_check
      _
    $region7: #{lstm_anomaly_detector_forward.1} parent=1 // pred_check_branch
      %17 = sbr.rel (0) target = $region9
    $region8: #{lstm_anomaly_detector_forward.1} parent=1 // pred_region
      _
    $region9: #{lstm_anomaly_detector_forward.1} parent=1 // pred_fallthru
      _
    // Predicated region
    $region10: #{lstm_anomaly_detector_forward.1} parent=1 // pred_check
      _
    $region11: #{lstm_anomaly_detector_forward.1} parent=1 // pred_check_branch
      %19 = sbr.rel (0) target = $region13
    $region12: #{lstm_anomaly_detector_forward.1} parent=1 // pred_region
      _
    $region13: #{lstm_anomaly_detector_forward.1} parent=1 // pred_fallthru
      _
    // Predicated region
    $region14: #{lstm_anomaly_detector_forward.1} parent=1 // pred_check
      _
    $region15: #{lstm_anomaly_detector_forward.1} parent=1 // pred_check_branch
      %21 = sbr.rel (0) target = $region17
    $region16: #{lstm_anomaly_detector_forward.1} parent=1 // pred_region
      _
    $region17: #{lstm_anomaly_detector_forward.1} parent=1 // pred_fallthru
      _
    // Predicated region
    $region18: #{lstm_anomaly_detector_forward.1} parent=1 // pred_check
      _
    $region19: #{lstm_anomaly_detector_forward.1} parent=1 // pred_check_branch
      %23 = sbr.rel (0) target = $region21
    $region20: #{lstm_anomaly_detector_forward.1} parent=1 // pred_region
      _
    $region21: #{lstm_anomaly_detector_forward.1} parent=1 // pred_fallthru
      _
    // Predicated region
    $region22: #{lstm_anomaly_detector_forward.1} parent=1 // pred_check
      _
    $region23: #{lstm_anomaly_detector_forward.1} parent=1 // pred_check_branch
      %25 = sbr.rel (0) target = $region25
    $region24: #{lstm_anomaly_detector_forward.1} parent=1 // pred_region
      _
    $region25: #{lstm_anomaly_detector_forward.1} parent=1 // pred_fallthru
      _
    // Predicated region
    $region26: #{lstm_anomaly_detector_forward.1} parent=1 // pred_check
      _
    $region27: #{lstm_anomaly_detector_forward.1} parent=1 // pred_check_branch
      %27 = sbr.rel (0) target = $region29
    $region28: #{lstm_anomaly_detector_forward.1} parent=1 // pred_region
      _
    $region29: #{lstm_anomaly_detector_forward.1} parent=1 // pred_fallthru
      _
    // Predicated region
    $region30: #{lstm_anomaly_detector_forward.1} parent=1 // pred_check
      _
    $region31: #{lstm_anomaly_detector_forward.1} parent=1 // pred_check_branch
      %29 = sbr.rel (0) target = $region33
    $region32: #{lstm_anomaly_detector_forward.1} parent=1 // pred_region
      _
    $region33: #{lstm_anomaly_detector_forward.1} parent=1 // pred_fallthru
      _
    %v31 = vlaneseq
    %v32 = vand.u32 %v31, 127
    %vm33 = vcmp.ge.s32.totalorder %v32, 64
    %vm34 = vcmp.lt.s32.totalorder %v32, 96
    %vm35 = vmand %vm33, %vm34
    %v36 = vld [vmem:[%s0] sm:$0xf]
    %v37 = vld [vmem:[%s0 + $0x4] sm:$0xf]
    %v38 = vld [vmem:[%s1] sm:$0x3]
    %v39 = vld [vmem:[%s2] sm:$0x1]
    %v41 = vlaneseq
    %v42 = vshrl.u32 %v41, 7
    %v43 = vsub.s32 0, %v42
    %v44 = vrot.slane %v39, %v43
    %v48 = vunpack.c.l.b16 %v36
    %v49 = vunpack.c.l.b16 %v37
    %v50 = vpack.c.b16 %v49, %v48
    %vm51 = vcmask 31744
    %v53 = vsel %vm51, %v50, 0
    %vm55 = vcmask 1041408
    %v57 = vsel %vm55, %v38, 0
    %59 = vmatprep.subr.bf16.mxu0 0
    %60 = vmatpush1.bf16.msra.mxu0 0
    %61 = vmatprep.subr.bf16.mxu0 0
    %62 = vmatpush1.bf16.msra.mxu0 0
    %63 = vmatprep.subr.bf16.mxu0 0
    %64 = vmatpush1.bf16.msra.mxu0 0
    %65 = vmatprep.subr.bf16.mxu0 0
    %66 = vmatpush1.bf16.msra.mxu0 0
    %67 = vmatprep.subr.bf16.mxu0 0
    %68 = vmatpush1.bf16.msra.mxu0 0
    %69 = vmatprep.subr.bf16.mxu0 0
    %70 = vmatpush1.bf16.msra.mxu0 0
    %71 = vmatprep.subr.bf16.mxu0 0
    %72 = vmatpush1.bf16.msra.mxu0 0
    %73 = vmatprep.subr.bf16.mxu0 0
    %74 = vmatpush1.bf16.msra.mxu0 %v57
    %75 = vmatprep.subr.bf16.mxu0 0
    %76 = vmatpush2.bf16.msra.mxu0 0
    %77 = vmatprep.subr.bf16.mxu0 0
    %78 = vmatpush2.bf16.msra.mxu0 0
    %79 = vmatprep.subr.bf16.mxu0 0
    %80 = vmatpush2.bf16.msra.mxu0 0
    %81 = vmatprep.subr.bf16.mxu0 0
    %82 = vmatpush2.bf16.msra.mxu0 0
    %83 = vmatprep.subr.bf16.mxu0 0
    %84 = vmatpush2.bf16.msra.mxu0 0
    %85 = vmatprep.subr.bf16.mxu0 0
    %86 = vmatpush2.bf16.msra.mxu0 0
    %87 = vmatprep.subr.bf16.mxu0 0
    %88 = vmatpush2.bf16.msra.mxu0 0
    %89 = vmatprep.subr.bf16.mxu0 0
    %90 = vmatpush2.bf16.msra.mxu0 0
    %91 = vmatprep.mubr.bf16.mxu0 0
    %92 = vmatmul.mubr.bf16.gmra.mxu0 %v53
    %v93 = vpop.f32.mrf.mxu0
    %v94 = vadd.f32 %v44, %v93
    %v95 = vpop.f32.mrf.mxu0
    %v96 = vpop.f32.mrf.mxu0
    %v97 = vadd.f32 %v44, %v96
    %v98 = vpop.f32.mrf.mxu0
    %99 = vdwg.mxu0
    %v100 = vld [vmem:[%s3] sm:$0xff]
    %v101 = vld [vmem:[%s3 + $0x8] sm:$0xff]
    %v102 = vld [vmem:[%s3 + $0x10] sm:$0xff]
    %v103 = vld [vmem:[%s3 + $0x18] sm:$0xff]
    %v104 = vld [vmem:[%s4] sm:$0x1]
    %v105 = vadd.f32 %v94, 0.0
    %v106 = vxor.u32 %v105, 2147483648
    %v107 = vmul.f32 %v106, 1.442695
    %v108 = vpow.pop %v107
    %v109 = vadd.f32 %v108, 1.0
    %v110 = vrcp.pop %v109
    %v111 = vmul.f32 1.0, %v110
    %v112 = vtanh.pop %v105
    %v113 = vsel %vm35, %v112, %v111
    %v114 = vmul.f32 %v113, 0.0
    %116 = vrot.lane.b32.xlu0 %v113, 64
    %v117 = vpop.permute.xlu0 %116
    %v119 = vmul.f32 %v113, %v117
    %121 = vrot.lane.b32.xlu0 %v119, 32
    %v122 = vpop.permute.xlu0 %121
    %v124 = vadd.f32 %v114, %v122
    %v125 = vtanh.pop %v124
    %127 = vrot.lane.b32.xlu0 %v125, 64
    %v128 = vpop.permute.xlu0 %127
    %v130 = vmul.f32 %v113, %v128
    %v131 = vpack.c.bf16 %v130, %v130
    %133 = vrot.lane.b32.xlu0 %v131, 32
    %v134 = vpop.permute.xlu0 %133
    %v139 = vunpack.c.l.b16 %v100
    %v140 = vunpack.c.h.b16 %v100
    %v141 = vunpack.c.l.b16 %v101
    %v142 = vunpack.c.h.b16 %v101
    %v143 = vunpack.c.l.b16 %v102
    %v144 = vunpack.c.h.b16 %v102
    %v145 = vunpack.c.l.b16 %v103
    %v146 = vunpack.c.h.b16 %v103
    %v147 = vpack.c.b16 %v141, %v139
    %v148 = vpack.c.b16 %v142, %v140
    %v149 = vpack.c.b16 %v145, %v143
    %v150 = vpack.c.b16 %v146, %v144
    %vm155 = vcmask 261120
    %v157 = vsel %vm155, %v134, 0
    %159 = vmatprep.subr.bf16.mxu0 0
    %160 = vmatpush1.bf16.msra.mxu0 0
    %161 = vmatprep.subr.bf16.mxu0 0
    %162 = vmatpush1.bf16.msra.mxu0 0
    %163 = vmatprep.subr.bf16.mxu0 0
    %164 = vmatpush1.bf16.msra.mxu0 0
    %165 = vmatprep.subr.bf16.mxu0 0
    %166 = vmatpush1.bf16.msra.mxu0 0
    %167 = vmatprep.subr.bf16.mxu0 0
    %168 = vmatpush1.bf16.msra.mxu0 0
    %169 = vmatprep.subr.bf16.mxu0 0
    %170 = vmatpush1.bf16.msra.mxu0 0
    %171 = vmatprep.subr.bf16.mxu0 %v150
    %172 = vmatpush1.bf16.msra.mxu0 %v149
    %173 = vmatprep.subr.bf16.mxu0 %v148
    %174 = vmatpush1.bf16.msra.mxu0 %v147
    %175 = vmatprep.subr.bf16.mxu0 0
    %176 = vmatpush2.bf16.msra.mxu0 0
    %177 = vmatprep.subr.bf16.mxu0 0
    %178 = vmatpush2.bf16.msra.mxu0 0
    %179 = vmatprep.subr.bf16.mxu0 0
    %180 = vmatpush2.bf16.msra.mxu0 0
    %181 = vmatprep.subr.bf16.mxu0 0
    %182 = vmatpush2.bf16.msra.mxu0 0
    %183 = vmatprep.subr.bf16.mxu0 0
    %184 = vmatpush2.bf16.msra.mxu0 0
    %185 = vmatprep.subr.bf16.mxu0 0
    %186 = vmatpush2.bf16.msra.mxu0 0
    %187 = vmatprep.subr.bf16.mxu0 0
    %188 = vmatpush2.bf16.msra.mxu0 0
    %189 = vmatprep.subr.bf16.mxu0 0
    %190 = vmatpush2.bf16.msra.mxu0 0
    %191 = vmatprep.mubr.bf16.mxu0 0
    %192 = vmatmul.mubr.bf16.gmra.mxu0 %v157
    %v193 = vpop.f32.mrf.mxu0
    %v194 = vadd.f32 0.0, %v193
    %v195 = vpop.f32.mrf.mxu0
    %v196 = vadd.f32 0.0, %v195
    %v197 = vpop.f32.mrf.mxu0
    %v198 = vpop.f32.mrf.mxu0
    %199 = vdwg.mxu0
    %v201 = vlaneseq
    %v202 = vshrl.u32 %v201, 7
    %v203 = vsub.s32 0, %v202
    %v204 = vrot.slane %v104, %v203
    %v206 = vadd.f32 %v196, %v204
    %v208 = vrot.slane %v194, 6
    %v210 = vadd.f32 %v94, %v208
    %v211 = vxor.u32 %v210, 2147483648
    %v212 = vmul.f32 %v211, 1.442695
    %v213 = vpow.pop %v212
    %v214 = vadd.f32 %v213, 1.0
    %v215 = vrcp.pop %v214
    %v216 = vmul.f32 1.0, %v215
    %v217 = vtanh.pop %v210
    %v218 = vsel %vm35, %v217, %v216
    %v220 = vrot.slane %v124, 6
    %v222 = vmul.f32 %v218, %v220
    %224 = vrot.lane.b32.xlu0 %v218, 64
    %v225 = vpop.permute.xlu0 %224
    %v227 = vmul.f32 %v218, %v225
    %229 = vrot.lane.b32.xlu0 %v227, 32
    %v230 = vpop.permute.xlu0 %229
    %v232 = vadd.f32 %v222, %v230
    %v233 = vtanh.pop %v232
    %235 = vrot.lane.b32.xlu0 %v233, 64
    %v236 = vpop.permute.xlu0 %235
    %v238 = vmul.f32 %v218, %v236
    %v239 = vpack.c.bf16 %v238, %v238
    %v241 = vrot.slane %v239, 1
    %242 = vrot.lane.b32.xlu0 %v241, 32
    %v243 = vpop.permute.xlu0 %242
    %v245 = vsel %vm155, %v243, 0
    %247 = vmatprep.subr.bf16.mxu0 0
    %248 = vmatpush1.bf16.msra.mxu0 0
    %249 = vmatprep.subr.bf16.mxu0 0
    %250 = vmatpush1.bf16.msra.mxu0 0
    %251 = vmatprep.subr.bf16.mxu0 0
    %252 = vmatpush1.bf16.msra.mxu0 0
    %253 = vmatprep.subr.bf16.mxu0 0
    %254 = vmatpush1.bf16.msra.mxu0 0
    %255 = vmatprep.subr.bf16.mxu0 0
    %256 = vmatpush1.bf16.msra.mxu0 0
    %257 = vmatprep.subr.bf16.mxu0 0
    %258 = vmatpush1.bf16.msra.mxu0 0
    %259 = vmatprep.subr.bf16.mxu0 %v150
    %260 = vmatpush1.bf16.msra.mxu0 %v149
    %261 = vmatprep.subr.bf16.mxu0 %v148
    %262 = vmatpush1.bf16.msra.mxu0 %v147
    %263 = vmatprep.subr.bf16.mxu0 0
    %264 = vmatpush2.bf16.msra.mxu0 0
    %265 = vmatprep.subr.bf16.mxu0 0
    %266 = vmatpush2.bf16.msra.mxu0 0
    %267 = vmatprep.subr.bf16.mxu0 0
    %268 = vmatpush2.bf16.msra.mxu0 0
    %269 = vmatprep.subr.bf16.mxu0 0
    %270 = vmatpush2.bf16.msra.mxu0 0
    %271 = vmatprep.subr.bf16.mxu0 0
    %272 = vmatpush2.bf16.msra.mxu0 0
    %273 = vmatprep.subr.bf16.mxu0 0
    %274 = vmatpush2.bf16.msra.mxu0 0
    %275 = vmatprep.subr.bf16.mxu0 0
    %276 = vmatpush2.bf16.msra.mxu0 0
    %277 = vmatprep.subr.bf16.mxu0 0
    %278 = vmatpush2.bf16.msra.mxu0 0
    %279 = vmatprep.mubr.bf16.mxu0 0
    %280 = vmatmul.mubr.bf16.gmra.mxu0 %v245
    %v281 = vpop.f32.mrf.mxu0
    %v282 = vadd.f32 0.0, %v281
    %v283 = vpop.f32.mrf.mxu0
    %v284 = vadd.f32 0.0, %v283
    %v285 = vpop.f32.mrf.mxu0
    %v286 = vpop.f32.mrf.mxu0
    %287 = vdwg.mxu0
    %v288 = vadd.f32 %v284, %v204
    %v290 = vrot.slane %v282, 4
    %v292 = vadd.f32 %v94, %v290
    %v293 = vxor.u32 %v292, 2147483648
    %v294 = vmul.f32 %v293, 1.442695
    %v295 = vpow.pop %v294
    %v296 = vadd.f32 %v295, 1.0
    %v297 = vrcp.pop %v296
    %v298 = vmul.f32 1.0, %v297
    %v299 = vtanh.pop %v292
    %v300 = vsel %vm35, %v299, %v298
    %v302 = vrot.slane %v232, 6
    %v304 = vmul.f32 %v300, %v302
    %306 = vrot.lane.b32.xlu0 %v300, 64
    %v307 = vpop.permute.xlu0 %306
    %v309 = vmul.f32 %v300, %v307
    %311 = vrot.lane.b32.xlu0 %v309, 32
    %v312 = vpop.permute.xlu0 %311
    %v314 = vadd.f32 %v304, %v312
    %v315 = vtanh.pop %v314
    %317 = vrot.lane.b32.xlu0 %v315, 64
    %v318 = vpop.permute.xlu0 %317
    %v320 = vmul.f32 %v300, %v318
    %v321 = vpack.c.bf16 %v320, %v320
    %v323 = vrot.slane %v321, 2
    %324 = vrot.lane.b32.xlu0 %v323, 32
    %v325 = vpop.permute.xlu0 %324
    %v327 = vsel %vm155, %v325, 0
    %329 = vmatprep.subr.bf16.mxu0 0
    %330 = vmatpush1.bf16.msra.mxu0 0
    %331 = vmatprep.subr.bf16.mxu0 0
    %332 = vmatpush1.bf16.msra.mxu0 0
    %333 = vmatprep.subr.bf16.mxu0 0
    %334 = vmatpush1.bf16.msra.mxu0 0
    %335 = vmatprep.subr.bf16.mxu0 0
    %336 = vmatpush1.bf16.msra.mxu0 0
    %337 = vmatprep.subr.bf16.mxu0 0
    %338 = vmatpush1.bf16.msra.mxu0 0
    %339 = vmatprep.subr.bf16.mxu0 0
    %340 = vmatpush1.bf16.msra.mxu0 0
    %341 = vmatprep.subr.bf16.mxu0 %v150
    %342 = vmatpush1.bf16.msra.mxu0 %v149
    %343 = vmatprep.subr.bf16.mxu0 %v148
    %344 = vmatpush1.bf16.msra.mxu0 %v147
    %345 = vmatprep.subr.bf16.mxu0 0
    %346 = vmatpush2.bf16.msra.mxu0 0
    %347 = vmatprep.subr.bf16.mxu0 0
    %348 = vmatpush2.bf16.msra.mxu0 0
    %349 = vmatprep.subr.bf16.mxu0 0
    %350 = vmatpush2.bf16.msra.mxu0 0
    %351 = vmatprep.subr.bf16.mxu0 0
    %352 = vmatpush2.bf16.msra.mxu0 0
    %353 = vmatprep.subr.bf16.mxu0 0
    %354 = vmatpush2.bf16.msra.mxu0 0
    %355 = vmatprep.subr.bf16.mxu0 0
    %356 = vmatpush2.bf16.msra.mxu0 0
    %357 = vmatprep.subr.bf16.mxu0 0
    %358 = vmatpush2.bf16.msra.mxu0 0
    %359 = vmatprep.subr.bf16.mxu0 0
    %360 = vmatpush2.bf16.msra.mxu0 0
    %361 = vmatprep.mubr.bf16.mxu0 0
    %362 = vmatmul.mubr.bf16.gmra.mxu0 %v327
    %v363 = vpop.f32.mrf.mxu0
    %v364 = vadd.f32 0.0, %v363
    %v365 = vpop.f32.mrf.mxu0
    %v366 = vadd.f32 0.0, %v365
    %v367 = vpop.f32.mrf.mxu0
    %v368 = vpop.f32.mrf.mxu0
    %369 = vdwg.mxu0
    %v370 = vadd.f32 %v366, %v204
    %v372 = vrot.slane %v364, 2
    %v374 = vadd.f32 %v94, %v372
    %v375 = vxor.u32 %v374, 2147483648
    %v376 = vmul.f32 %v375, 1.442695
    %v377 = vpow.pop %v376
    %v378 = vadd.f32 %v377, 1.0
    %v379 = vrcp.pop %v378
    %v380 = vmul.f32 1.0, %v379
    %v381 = vtanh.pop %v374
    %v382 = vsel %vm35, %v381, %v380
    %v384 = vrot.slane %v314, 6
    %v386 = vmul.f32 %v382, %v384
    %388 = vrot.lane.b32.xlu0 %v382, 64
    %v389 = vpop.permute.xlu0 %388
    %v391 = vmul.f32 %v382, %v389
    %393 = vrot.lane.b32.xlu0 %v391, 32
    %v394 = vpop.permute.xlu0 %393
    %v396 = vadd.f32 %v386, %v394
    %v397 = vtanh.pop %v396
    %399 = vrot.lane.b32.xlu0 %v397, 64
    %v400 = vpop.permute.xlu0 %399
    %v402 = vmul.f32 %v382, %v400
    %v403 = vpack.c.bf16 %v402, %v402
    %v405 = vrot.slane %v403, 3
    %406 = vrot.lane.b32.xlu0 %v405, 32
    %v407 = vpop.permute.xlu0 %406
    %v409 = vsel %vm155, %v407, 0
    %411 = vmatprep.subr.bf16.mxu0 0
    %412 = vmatpush1.bf16.msra.mxu0 0
    %413 = vmatprep.subr.bf16.mxu0 0
    %414 = vmatpush1.bf16.msra.mxu0 0
    %415 = vmatprep.subr.bf16.mxu0 0
    %416 = vmatpush1.bf16.msra.mxu0 0
    %417 = vmatprep.subr.bf16.mxu0 0
    %418 = vmatpush1.bf16.msra.mxu0 0
    %419 = vmatprep.subr.bf16.mxu0 0
    %420 = vmatpush1.bf16.msra.mxu0 0
    %421 = vmatprep.subr.bf16.mxu0 0
    %422 = vmatpush1.bf16.msra.mxu0 0
    %423 = vmatprep.subr.bf16.mxu0 %v150
    %424 = vmatpush1.bf16.msra.mxu0 %v149
    %425 = vmatprep.subr.bf16.mxu0 %v148
    %426 = vmatpush1.bf16.msra.mxu0 %v147
    %427 = vmatprep.subr.bf16.mxu0 0
    %428 = vmatpush2.bf16.msra.mxu0 0
    %429 = vmatprep.subr.bf16.mxu0 0
    %430 = vmatpush2.bf16.msra.mxu0 0
    %431 = vmatprep.subr.bf16.mxu0 0
    %432 = vmatpush2.bf16.msra.mxu0 0
    %433 = vmatprep.subr.bf16.mxu0 0
    %434 = vmatpush2.bf16.msra.mxu0 0
    %435 = vmatprep.subr.bf16.mxu0 0
    %436 = vmatpush2.bf16.msra.mxu0 0
    %437 = vmatprep.subr.bf16.mxu0 0
    %438 = vmatpush2.bf16.msra.mxu0 0
    %439 = vmatprep.subr.bf16.mxu0 0
    %440 = vmatpush2.bf16.msra.mxu0 0
    %441 = vmatprep.subr.bf16.mxu0 0
    %442 = vmatpush2.bf16.msra.mxu0 0
    %443 = vmatprep.mubr.bf16.mxu0 0
    %444 = vmatmul.mubr.bf16.gmra.mxu0 %v409
    %v445 = vpop.f32.mrf.mxu0
    %v446 = vadd.f32 0.0, %v445
    %v447 = vpop.f32.mrf.mxu0
    %v448 = vadd.f32 0.0, %v447
    %v449 = vpop.f32.mrf.mxu0
    %v450 = vpop.f32.mrf.mxu0
    %451 = vdwg.mxu0
    %v452 = vadd.f32 %v448, %v204
    %v453 = vadd.f32 %v97, %v446
    %v454 = vxor.u32 %v453, 2147483648
    %v455 = vmul.f32 %v454, 1.442695
    %v456 = vpow.pop %v455
    %v457 = vadd.f32 %v456, 1.0
    %v458 = vrcp.pop %v457
    %v459 = vmul.f32 1.0, %v458
    %v460 = vtanh.pop %v453
    %v461 = vsel %vm35, %v460, %v459
    %v463 = vrot.slane %v396, 6
    %v465 = vmul.f32 %v461, %v463
    %467 = vrot.lane.b32.xlu0 %v461, 64
    %v468 = vpop.permute.xlu0 %467
    %v470 = vmul.f32 %v461, %v468
    %472 = vrot.lane.b32.xlu0 %v470, 32
    %v473 = vpop.permute.xlu0 %472
    %v475 = vadd.f32 %v465, %v473
    %v476 = vtanh.pop %v475
    %478 = vrot.lane.b32.xlu0 %v476, 64
    %v479 = vpop.permute.xlu0 %478
    %v481 = vmul.f32 %v461, %v479
    %v482 = vpack.c.bf16 %v481, %v481
    %484 = vrot.lane.b32.xlu0 %v482, 32
    %v485 = vpop.permute.xlu0 %484
    %v487 = vsel %vm155, %v485, 0
    %489 = vmatprep.subr.bf16.mxu0 0
    %490 = vmatpush1.bf16.msra.mxu0 0
    %491 = vmatprep.subr.bf16.mxu0 0
    %492 = vmatpush1.bf16.msra.mxu0 0
    %493 = vmatprep.subr.bf16.mxu0 0
    %494 = vmatpush1.bf16.msra.mxu0 0
    %495 = vmatprep.subr.bf16.mxu0 0
    %496 = vmatpush1.bf16.msra.mxu0 0
    %497 = vmatprep.subr.bf16.mxu0 0
    %498 = vmatpush1.bf16.msra.mxu0 0
    %499 = vmatprep.subr.bf16.mxu0 0
    %500 = vmatpush1.bf16.msra.mxu0 0
    %501 = vmatprep.subr.bf16.mxu0 %v150
    %502 = vmatpush1.bf16.msra.mxu0 %v149
    %503 = vmatprep.subr.bf16.mxu0 %v148
    %504 = vmatpush1.bf16.msra.mxu0 %v147
    %505 = vmatprep.subr.bf16.mxu0 0
    %506 = vmatpush2.bf16.msra.mxu0 0
    %507 = vmatprep.subr.bf16.mxu0 0
    %508 = vmatpush2.bf16.msra.mxu0 0
    %509 = vmatprep.subr.bf16.mxu0 0
    %510 = vmatpush2.bf16.msra.mxu0 0
    %511 = vmatprep.subr.bf16.mxu0 0
    %512 = vmatpush2.bf16.msra.mxu0 0
    %513 = vmatprep.subr.bf16.mxu0 0
    %514 = vmatpush2.bf16.msra.mxu0 0
    %515 = vmatprep.subr.bf16.mxu0 0
    %516 = vmatpush2.bf16.msra.mxu0 0
    %517 = vmatprep.subr.bf16.mxu0 0
    %518 = vmatpush2.bf16.msra.mxu0 0
    %519 = vmatprep.subr.bf16.mxu0 0
    %520 = vmatpush2.bf16.msra.mxu0 0
    %521 = vmatprep.mubr.bf16.mxu0 0
    %522 = vmatmul.mubr.bf16.gmra.mxu0 %v487
    %v523 = vpop.f32.mrf.mxu0
    %v524 = vadd.f32 0.0, %v523
    %v525 = vpop.f32.mrf.mxu0
    %v526 = vadd.f32 0.0, %v525
    %v527 = vpop.f32.mrf.mxu0
    %v528 = vpop.f32.mrf.mxu0
    %529 = vdwg.mxu0
    %v530 = vadd.f32 %v526, %v204
    %v532 = vrot.slane %v524, 6
    %v534 = vadd.f32 %v97, %v532
    %v535 = vxor.u32 %v534, 2147483648
    %v536 = vmul.f32 %v535, 1.442695
    %v537 = vpow.pop %v536
    %v538 = vadd.f32 %v537, 1.0
    %v539 = vrcp.pop %v538
    %v540 = vmul.f32 1.0, %v539
    %v541 = vtanh.pop %v534
    %v542 = vsel %vm35, %v541, %v540
    %v544 = vrot.slane %v475, 6
    %v546 = vmul.f32 %v542, %v544
    %548 = vrot.lane.b32.xlu0 %v542, 64
    %v549 = vpop.permute.xlu0 %548
    %v551 = vmul.f32 %v542, %v549
    %553 = vrot.lane.b32.xlu0 %v551, 32
    %v554 = vpop.permute.xlu0 %553
    %v556 = vadd.f32 %v546, %v554
    %v557 = vtanh.pop %v556
    %559 = vrot.lane.b32.xlu0 %v557, 64
    %v560 = vpop.permute.xlu0 %559
    %v562 = vmul.f32 %v542, %v560
    %v563 = vpack.c.bf16 %v562, %v562
    %v565 = vrot.slane %v563, 1
    %566 = vrot.lane.b32.xlu0 %v565, 32
    %v567 = vpop.permute.xlu0 %566
    %v569 = vsel %vm155, %v567, 0
    %571 = vmatprep.subr.bf16.mxu0 0
    %572 = vmatpush1.bf16.msra.mxu0 0
    %573 = vmatprep.subr.bf16.mxu0 0
    %574 = vmatpush1.bf16.msra.mxu0 0
    %575 = vmatprep.subr.bf16.mxu0 0
    %576 = vmatpush1.bf16.msra.mxu0 0
    %577 = vmatprep.subr.bf16.mxu0 0
    %578 = vmatpush1.bf16.msra.mxu0 0
    %579 = vmatprep.subr.bf16.mxu0 0
    %580 = vmatpush1.bf16.msra.mxu0 0
    %581 = vmatprep.subr.bf16.mxu0 0
    %582 = vmatpush1.bf16.msra.mxu0 0
    %583 = vmatprep.subr.bf16.mxu0 %v150
    %584 = vmatpush1.bf16.msra.mxu0 %v149
    %585 = vmatprep.subr.bf16.mxu0 %v148
    %586 = vmatpush1.bf16.msra.mxu0 %v147
    %587 = vmatprep.subr.bf16.mxu0 0
    %588 = vmatpush2.bf16.msra.mxu0 0
    %589 = vmatprep.subr.bf16.mxu0 0
    %590 = vmatpush2.bf16.msra.mxu0 0
    %591 = vmatprep.subr.bf16.mxu0 0
    %592 = vmatpush2.bf16.msra.mxu0 0
    %593 = vmatprep.subr.bf16.mxu0 0
    %594 = vmatpush2.bf16.msra.mxu0 0
    %595 = vmatprep.subr.bf16.mxu0 0
    %596 = vmatpush2.bf16.msra.mxu0 0
    %597 = vmatprep.subr.bf16.mxu0 0
    %598 = vmatpush2.bf16.msra.mxu0 0
    %599 = vmatprep.subr.bf16.mxu0 0
    %600 = vmatpush2.bf16.msra.mxu0 0
    %601 = vmatprep.subr.bf16.mxu0 0
    %602 = vmatpush2.bf16.msra.mxu0 0
    %603 = vmatprep.mubr.bf16.mxu0 0
    %604 = vmatmul.mubr.bf16.gmra.mxu0 %v569
    %v605 = vpop.f32.mrf.mxu0
    %v606 = vadd.f32 0.0, %v605
    %v607 = vpop.f32.mrf.mxu0
    %v608 = vadd.f32 0.0, %v607
    %v609 = vpop.f32.mrf.mxu0
    %v610 = vpop.f32.mrf.mxu0
    %611 = vdwg.mxu0
    %v612 = vadd.f32 %v608, %v204
    %v614 = vrot.slane %v606, 4
    %v616 = vadd.f32 %v97, %v614
    %v617 = vxor.u32 %v616, 2147483648
    %v618 = vmul.f32 %v617, 1.442695
    %v619 = vpow.pop %v618
    %v620 = vadd.f32 %v619, 1.0
    %v621 = vrcp.pop %v620
    %v622 = vmul.f32 1.0, %v621
    %v623 = vtanh.pop %v616
    %v624 = vsel %vm35, %v623, %v622
    %v626 = vrot.slane %v556, 6
    %v628 = vmul.f32 %v624, %v626
    %630 = vrot.lane.b32.xlu0 %v624, 64
    %v631 = vpop.permute.xlu0 %630
    %v633 = vmul.f32 %v624, %v631
    %635 = vrot.lane.b32.xlu0 %v633, 32
    %v636 = vpop.permute.xlu0 %635
    %v638 = vadd.f32 %v628, %v636
    %v639 = vtanh.pop %v638
    %641 = vrot.lane.b32.xlu0 %v639, 64
    %v642 = vpop.permute.xlu0 %641
    %v644 = vmul.f32 %v624, %v642
    %v645 = vpack.c.bf16 %v644, %v644
    %v647 = vrot.slane %v645, 2
    %648 = vrot.lane.b32.xlu0 %v647, 32
    %v649 = vpop.permute.xlu0 %648
    %v651 = vsel %vm155, %v649, 0
    %653 = vmatprep.subr.bf16.mxu0 0
    %654 = vmatpush1.bf16.msra.mxu0 0
    %655 = vmatprep.subr.bf16.mxu0 0
    %656 = vmatpush1.bf16.msra.mxu0 0
    %657 = vmatprep.subr.bf16.mxu0 0
    %658 = vmatpush1.bf16.msra.mxu0 0
    %659 = vmatprep.subr.bf16.mxu0 0
    %660 = vmatpush1.bf16.msra.mxu0 0
    %661 = vmatprep.subr.bf16.mxu0 0
    %662 = vmatpush1.bf16.msra.mxu0 0
    %663 = vmatprep.subr.bf16.mxu0 0
    %664 = vmatpush1.bf16.msra.mxu0 0
    %665 = vmatprep.subr.bf16.mxu0 %v150
    %666 = vmatpush1.bf16.msra.mxu0 %v149
    %667 = vmatprep.subr.bf16.mxu0 %v148
    %668 = vmatpush1.bf16.msra.mxu0 %v147
    %669 = vmatprep.subr.bf16.mxu0 0
    %670 = vmatpush2.bf16.msra.mxu0 0
    %671 = vmatprep.subr.bf16.mxu0 0
    %672 = vmatpush2.bf16.msra.mxu0 0
    %673 = vmatprep.subr.bf16.mxu0 0
    %674 = vmatpush2.bf16.msra.mxu0 0
    %675 = vmatprep.subr.bf16.mxu0 0
    %676 = vmatpush2.bf16.msra.mxu0 0
    %677 = vmatprep.subr.bf16.mxu0 0
    %678 = vmatpush2.bf16.msra.mxu0 0
    %679 = vmatprep.subr.bf16.mxu0 0
    %680 = vmatpush2.bf16.msra.mxu0 0
    %681 = vmatprep.subr.bf16.mxu0 0
    %682 = vmatpush2.bf16.msra.mxu0 0
    %683 = vmatprep.subr.bf16.mxu0 0
    %684 = vmatpush2.bf16.msra.mxu0 0
    %685 = vmatprep.mubr.bf16.mxu0 0
    %686 = vmatmul.mubr.bf16.gmra.mxu0 %v651
    %v687 = vpop.f32.mrf.mxu0
    %v688 = vadd.f32 0.0, %v687
    %v689 = vpop.f32.mrf.mxu0
    %v690 = vadd.f32 0.0, %v689
    %v691 = vpop.f32.mrf.mxu0
    %v692 = vpop.f32.mrf.mxu0
    %693 = vdwg.mxu0
    %v694 = vadd.f32 %v690, %v204
    %v696 = vrot.slane %v688, 2
    %v698 = vadd.f32 %v97, %v696
    %v699 = vxor.u32 %v698, 2147483648
    %v700 = vmul.f32 %v699, 1.442695
    %v701 = vpow.pop %v700
    %v702 = vadd.f32 %v701, 1.0
    %v703 = vrcp.pop %v702
    %v704 = vmul.f32 1.0, %v703
    %v705 = vtanh.pop %v698
    %v706 = vsel %vm35, %v705, %v704
    %v708 = vrot.slane %v638, 6
    %v710 = vmul.f32 %v706, %v708
    %712 = vrot.lane.b32.xlu0 %v706, 64
    %v713 = vpop.permute.xlu0 %712
    %v715 = vmul.f32 %v706, %v713
    %717 = vrot.lane.b32.xlu0 %v715, 32
    %v718 = vpop.permute.xlu0 %717
    %v720 = vadd.f32 %v710, %v718
    %v721 = vtanh.pop %v720
    %723 = vrot.lane.b32.xlu0 %v721, 64
    %v724 = vpop.permute.xlu0 %723
    %v726 = vmul.f32 %v706, %v724
    %v727 = vpack.c.bf16 %v726, %v726
    %v729 = vrot.slane %v727, 3
    %730 = vrot.lane.b32.xlu0 %v729, 32
    %v731 = vpop.permute.xlu0 %730
    %v733 = vsel %vm155, %v731, 0
    %735 = vmatprep.subr.bf16.mxu0 0
    %736 = vmatpush1.bf16.msra.mxu0 0
    %737 = vmatprep.subr.bf16.mxu0 0
    %738 = vmatpush1.bf16.msra.mxu0 0
    %739 = vmatprep.subr.bf16.mxu0 0
    %740 = vmatpush1.bf16.msra.mxu0 0
    %741 = vmatprep.subr.bf16.mxu0 0
    %742 = vmatpush1.bf16.msra.mxu0 0
    %743 = vmatprep.subr.bf16.mxu0 0
    %744 = vmatpush1.bf16.msra.mxu0 0
    %745 = vmatprep.subr.bf16.mxu0 0
    %746 = vmatpush1.bf16.msra.mxu0 0
    %747 = vmatprep.subr.bf16.mxu0 %v150
    %748 = vmatpush1.bf16.msra.mxu0 %v149
    %749 = vmatprep.subr.bf16.mxu0 %v148
    %750 = vmatpush1.bf16.msra.mxu0 %v147
    %751 = vmatprep.subr.bf16.mxu0 0
    %752 = vmatpush2.bf16.msra.mxu0 0
    %753 = vmatprep.subr.bf16.mxu0 0
    %754 = vmatpush2.bf16.msra.mxu0 0
    %755 = vmatprep.subr.bf16.mxu0 0
    %756 = vmatpush2.bf16.msra.mxu0 0
    %757 = vmatprep.subr.bf16.mxu0 0
    %758 = vmatpush2.bf16.msra.mxu0 0
    %759 = vmatprep.subr.bf16.mxu0 0
    %760 = vmatpush2.bf16.msra.mxu0 0
    %761 = vmatprep.subr.bf16.mxu0 0
    %762 = vmatpush2.bf16.msra.mxu0 0
    %763 = vmatprep.subr.bf16.mxu0 0
    %764 = vmatpush2.bf16.msra.mxu0 0
    %765 = vmatprep.subr.bf16.mxu0 0
    %766 = vmatpush2.bf16.msra.mxu0 0
    %767 = vmatprep.mubr.bf16.mxu0 0
    %768 = vmatmul.mubr.bf16.gmra.mxu0 %v733
    %v769 = vpop.f32.mrf.mxu0
    %v770 = vpop.f32.mrf.mxu0
    %v771 = vadd.f32 0.0, %v770
    %v772 = vpop.f32.mrf.mxu0
    %v773 = vpop.f32.mrf.mxu0
    %774 = vdwg.mxu0
    %v775 = vadd.f32 %v771, %v204
    %v776 = vld [vmem:[%s5] sm:$0xf]
    %v777 = vld [vmem:[%s5 + $0x4] sm:$0xf]
    %v778 = vld [vmem:[%s5 + $0x8] sm:$0xf]
    %v779 = vld [vmem:[%s5 + $0xc] sm:$0xf]
    %v780 = vadd.f32 %v206, 0.0
    %v781 = vxor.u32 %v780, 2147483648
    %v782 = vmul.f32 %v781, 1.442695
    %v783 = vpow.pop %v782
    %v784 = vadd.f32 %v783, 1.0
    %v785 = vrcp.pop %v784
    %v786 = vmul.f32 1.0, %v785
    %v787 = vtanh.pop %v780
    %v788 = vsel %vm35, %v787, %v786
    %v789 = vmul.f32 %v788, 0.0
    %791 = vrot.lane.b32.xlu0 %v788, 64
    %v792 = vpop.permute.xlu0 %791
    %v794 = vmul.f32 %v788, %v792
    %796 = vrot.lane.b32.xlu0 %v794, 32
    %v797 = vpop.permute.xlu0 %796
    %v799 = vadd.f32 %v789, %v797
    %v800 = vtanh.pop %v799
    %802 = vrot.lane.b32.xlu0 %v800, 64
    %v803 = vpop.permute.xlu0 %802
    %v805 = vmul.f32 %v788, %v803
    %v806 = vpack.c.bf16 %v805, %v805
    %808 = vrot.lane.b32.xlu0 %v806, 32
    %v809 = vpop.permute.xlu0 %808
    %v814 = vunpack.c.l.b16 %v776
    %v815 = vunpack.c.l.b16 %v777
    %v816 = vunpack.c.l.b16 %v778
    %v817 = vunpack.c.l.b16 %v779
    %v818 = vpack.c.b16 %v815, %v814
    %v819 = vpack.c.b16 %v817, %v816
    %v823 = vsel %vm155, %v809, 0
    %825 = vmatprep.subr.bf16.mxu0 0
    %826 = vmatpush1.bf16.msra.mxu0 0
    %827 = vmatprep.subr.bf16.mxu0 0
    %828 = vmatpush1.bf16.msra.mxu0 0
    %829 = vmatprep.subr.bf16.mxu0 0
    %830 = vmatpush1.bf16.msra.mxu0 0
    %831 = vmatprep.subr.bf16.mxu0 0
    %832 = vmatpush1.bf16.msra.mxu0 0
    %833 = vmatprep.subr.bf16.mxu0 0
    %834 = vmatpush1.bf16.msra.mxu0 0
    %835 = vmatprep.subr.bf16.mxu0 0
    %836 = vmatpush1.bf16.msra.mxu0 0
    %837 = vmatprep.subr.bf16.mxu0 0
    %838 = vmatpush1.bf16.msra.mxu0 %v819
    %839 = vmatprep.subr.bf16.mxu0 0
    %840 = vmatpush1.bf16.msra.mxu0 %v818
    %841 = vmatprep.subr.bf16.mxu0 0
    %842 = vmatpush2.bf16.msra.mxu0 0
    %843 = vmatprep.subr.bf16.mxu0 0
    %844 = vmatpush2.bf16.msra.mxu0 0
    %845 = vmatprep.subr.bf16.mxu0 0
    %846 = vmatpush2.bf16.msra.mxu0 0
    %847 = vmatprep.subr.bf16.mxu0 0
    %848 = vmatpush2.bf16.msra.mxu0 0
    %849 = vmatprep.subr.bf16.mxu0 0
    %850 = vmatpush2.bf16.msra.mxu0 0
    %851 = vmatprep.subr.bf16.mxu0 0
    %852 = vmatpush2.bf16.msra.mxu0 0
    %853 = vmatprep.subr.bf16.mxu0 0
    %854 = vmatpush2.bf16.msra.mxu0 0
    %855 = vmatprep.subr.bf16.mxu0 0
    %856 = vmatpush2.bf16.msra.mxu0 0
    %857 = vmatprep.mubr.bf16.mxu0 0
    %858 = vmatmul.mubr.bf16.gmra.mxu0 %v823
    %v859 = vpop.f32.mrf.mxu0
    %v860 = vadd.f32 0.0, %v859
    %v861 = vpop.f32.mrf.mxu0
    %v862 = vpop.f32.mrf.mxu0
    %v863 = vpop.f32.mrf.mxu0
    %864 = vdwg.mxu0
    %v865 = vadd.f32 %v288, %v860
    %v866 = vxor.u32 %v865, 2147483648
    %v867 = vmul.f32 %v866, 1.442695
    %v868 = vpow.pop %v867
    %v869 = vadd.f32 %v868, 1.0
    %v870 = vrcp.pop %v869
    %v871 = vmul.f32 1.0, %v870
    %v872 = vtanh.pop %v865
    %v873 = vsel %vm35, %v872, %v871
    %v874 = vmul.f32 %v873, %v799
    %876 = vrot.lane.b32.xlu0 %v873, 64
    %v877 = vpop.permute.xlu0 %876
    %v879 = vmul.f32 %v873, %v877
    %881 = vrot.lane.b32.xlu0 %v879, 32
    %v882 = vpop.permute.xlu0 %881
    %v884 = vadd.f32 %v874, %v882
    %v885 = vtanh.pop %v884
    %887 = vrot.lane.b32.xlu0 %v885, 64
    %v888 = vpop.permute.xlu0 %887
    %v890 = vmul.f32 %v873, %v888
    %v891 = vpack.c.bf16 %v890, %v890
    %893 = vrot.lane.b32.xlu0 %v891, 32
    %v894 = vpop.permute.xlu0 %893
    %v896 = vsel %vm155, %v894, 0
    %898 = vmatprep.subr.bf16.mxu0 0
    %899 = vmatpush1.bf16.msra.mxu0 0
    %900 = vmatprep.subr.bf16.mxu0 0
    %901 = vmatpush1.bf16.msra.mxu0 0
    %902 = vmatprep.subr.bf16.mxu0 0
    %903 = vmatpush1.bf16.msra.mxu0 0
    %904 = vmatprep.subr.bf16.mxu0 0
    %905 = vmatpush1.bf16.msra.mxu0 0
    %906 = vmatprep.subr.bf16.mxu0 0
    %907 = vmatpush1.bf16.msra.mxu0 0
    %908 = vmatprep.subr.bf16.mxu0 0
    %909 = vmatpush1.bf16.msra.mxu0 0
    %910 = vmatprep.subr.bf16.mxu0 0
    %911 = vmatpush1.bf16.msra.mxu0 %v819
    %912 = vmatprep.subr.bf16.mxu0 0
    %913 = vmatpush1.bf16.msra.mxu0 %v818
    %914 = vmatprep.subr.bf16.mxu0 0
    %915 = vmatpush2.bf16.msra.mxu0 0
    %916 = vmatprep.subr.bf16.mxu0 0
    %917 = vmatpush2.bf16.msra.mxu0 0
    %918 = vmatprep.subr.bf16.mxu0 0
    %919 = vmatpush2.bf16.msra.mxu0 0
    %920 = vmatprep.subr.bf16.mxu0 0
    %921 = vmatpush2.bf16.msra.mxu0 0
    %922 = vmatprep.subr.bf16.mxu0 0
    %923 = vmatpush2.bf16.msra.mxu0 0
    %924 = vmatprep.subr.bf16.mxu0 0
    %925 = vmatpush2.bf16.msra.mxu0 0
    %926 = vmatprep.subr.bf16.mxu0 0
    %927 = vmatpush2.bf16.msra.mxu0 0
    %928 = vmatprep.subr.bf16.mxu0 0
    %929 = vmatpush2.bf16.msra.mxu0 0
    %930 = vmatprep.mubr.bf16.mxu0 0
    %931 = vmatmul.mubr.bf16.gmra.mxu0 %v896
    %v932 = vpop.f32.mrf.mxu0
    %v933 = vadd.f32 0.0, %v932
    %v934 = vpop.f32.mrf.mxu0
    %v935 = vpop.f32.mrf.mxu0
    %v936 = vpop.f32.mrf.mxu0
    %937 = vdwg.mxu0
    %v938 = vadd.f32 %v370, %v933
    %v939 = vxor.u32 %v938, 2147483648
    %v940 = vmul.f32 %v939, 1.442695
    %v941 = vpow.pop %v940
    %v942 = vadd.f32 %v941, 1.0
    %v943 = vrcp.pop %v942
    %v944 = vmul.f32 1.0, %v943
    %v945 = vtanh.pop %v938
    %v946 = vsel %vm35, %v945, %v944
    %v947 = vmul.f32 %v946, %v884
    %949 = vrot.lane.b32.xlu0 %v946, 64
    %v950 = vpop.permute.xlu0 %949
    %v952 = vmul.f32 %v946, %v950
    %954 = vrot.lane.b32.xlu0 %v952, 32
    %v955 = vpop.permute.xlu0 %954
    %v957 = vadd.f32 %v947, %v955
    %v958 = vtanh.pop %v957
    %960 = vrot.lane.b32.xlu0 %v958, 64
    %v961 = vpop.permute.xlu0 %960
    %v963 = vmul.f32 %v946, %v961
    %v964 = vpack.c.bf16 %v963, %v963
    %966 = vrot.lane.b32.xlu0 %v964, 32
    %v967 = vpop.permute.xlu0 %966
    %v969 = vsel %vm155, %v967, 0
    %971 = vmatprep.subr.bf16.mxu0 0
    %972 = vmatpush1.bf16.msra.mxu0 0
    %973 = vmatprep.subr.bf16.mxu0 0
    %974 = vmatpush1.bf16.msra.mxu0 0
    %975 = vmatprep.subr.bf16.mxu0 0
    %976 = vmatpush1.bf16.msra.mxu0 0
    %977 = vmatprep.subr.bf16.mxu0 0
    %978 = vmatpush1.bf16.msra.mxu0 0
    %979 = vmatprep.subr.bf16.mxu0 0
    %980 = vmatpush1.bf16.msra.mxu0 0
    %981 = vmatprep.subr.bf16.mxu0 0
    %982 = vmatpush1.bf16.msra.mxu0 0
    %983 = vmatprep.subr.bf16.mxu0 0
    %984 = vmatpush1.bf16.msra.mxu0 %v819
    %985 = vmatprep.subr.bf16.mxu0 0
    %986 = vmatpush1.bf16.msra.mxu0 %v818
    %987 = vmatprep.subr.bf16.mxu0 0
    %988 = vmatpush2.bf16.msra.mxu0 0
    %989 = vmatprep.subr.bf16.mxu0 0
    %990 = vmatpush2.bf16.msra.mxu0 0
    %991 = vmatprep.subr.bf16.mxu0 0
    %992 = vmatpush2.bf16.msra.mxu0 0
    %993 = vmatprep.subr.bf16.mxu0 0
    %994 = vmatpush2.bf16.msra.mxu0 0
    %995 = vmatprep.subr.bf16.mxu0 0
    %996 = vmatpush2.bf16.msra.mxu0 0
    %997 = vmatprep.subr.bf16.mxu0 0
    %998 = vmatpush2.bf16.msra.mxu0 0
    %999 = vmatprep.subr.bf16.mxu0 0
    %1000 = vmatpush2.bf16.msra.mxu0 0
    %1001 = vmatprep.subr.bf16.mxu0 0
    %1002 = vmatpush2.bf16.msra.mxu0 0
    %1003 = vmatprep.mubr.bf16.mxu0 0
    %1004 = vmatmul.mubr.bf16.gmra.mxu0 %v969
    %v1005 = vpop.f32.mrf.mxu0
    %v1006 = vadd.f32 0.0, %v1005
    %v1007 = vpop.f32.mrf.mxu0
    %v1008 = vpop.f32.mrf.mxu0
    %v1009 = vpop.f32.mrf.mxu0
    %1010 = vdwg.mxu0
    %v1011 = vadd.f32 %v452, %v1006
    %v1012 = vxor.u32 %v1011, 2147483648
    %v1013 = vmul.f32 %v1012, 1.442695
    %v1014 = vpow.pop %v1013
    %v1015 = vadd.f32 %v1014, 1.0
    %v1016 = vrcp.pop %v1015
    %v1017 = vmul.f32 1.0, %v1016
    %v1018 = vtanh.pop %v1011
    %v1019 = vsel %vm35, %v1018, %v1017
    %v1020 = vmul.f32 %v1019, %v957
    %1022 = vrot.lane.b32.xlu0 %v1019, 64
    %v1023 = vpop.permute.xlu0 %1022
    %v1025 = vmul.f32 %v1019, %v1023
    %1027 = vrot.lane.b32.xlu0 %v1025, 32
    %v1028 = vpop.permute.xlu0 %1027
    %v1030 = vadd.f32 %v1020, %v1028
    %v1031 = vtanh.pop %v1030
    %1033 = vrot.lane.b32.xlu0 %v1031, 64
    %v1034 = vpop.permute.xlu0 %1033
    %v1036 = vmul.f32 %v1019, %v1034
    %v1037 = vpack.c.bf16 %v1036, %v1036
    %1039 = vrot.lane.b32.xlu0 %v1037, 32
    %v1040 = vpop.permute.xlu0 %1039
    %v1042 = vsel %vm155, %v1040, 0
    %1044 = vmatprep.subr.bf16.mxu0 0
    %1045 = vmatpush1.bf16.msra.mxu0 0
    %1046 = vmatprep.subr.bf16.mxu0 0
    %1047 = vmatpush1.bf16.msra.mxu0 0
    %1048 = vmatprep.subr.bf16.mxu0 0
    %1049 = vmatpush1.bf16.msra.mxu0 0
    %1050 = vmatprep.subr.bf16.mxu0 0
    %1051 = vmatpush1.bf16.msra.mxu0 0
    %1052 = vmatprep.subr.bf16.mxu0 0
    %1053 = vmatpush1.bf16.msra.mxu0 0
    %1054 = vmatprep.subr.bf16.mxu0 0
    %1055 = vmatpush1.bf16.msra.mxu0 0
    %1056 = vmatprep.subr.bf16.mxu0 0
    %1057 = vmatpush1.bf16.msra.mxu0 %v819
    %1058 = vmatprep.subr.bf16.mxu0 0
    %1059 = vmatpush1.bf16.msra.mxu0 %v818
    %1060 = vmatprep.subr.bf16.mxu0 0
    %1061 = vmatpush2.bf16.msra.mxu0 0
    %1062 = vmatprep.subr.bf16.mxu0 0
    %1063 = vmatpush2.bf16.msra.mxu0 0
    %1064 = vmatprep.subr.bf16.mxu0 0
    %1065 = vmatpush2.bf16.msra.mxu0 0
    %1066 = vmatprep.subr.bf16.mxu0 0
    %1067 = vmatpush2.bf16.msra.mxu0 0
    %1068 = vmatprep.subr.bf16.mxu0 0
    %1069 = vmatpush2.bf16.msra.mxu0 0
    %1070 = vmatprep.subr.bf16.mxu0 0
    %1071 = vmatpush2.bf16.msra.mxu0 0
    %1072 = vmatprep.subr.bf16.mxu0 0
    %1073 = vmatpush2.bf16.msra.mxu0 0
    %1074 = vmatprep.subr.bf16.mxu0 0
    %1075 = vmatpush2.bf16.msra.mxu0 0
    %1076 = vmatprep.mubr.bf16.mxu0 0
    %1077 = vmatmul.mubr.bf16.gmra.mxu0 %v1042
    %v1078 = vpop.f32.mrf.mxu0
    %v1079 = vadd.f32 0.0, %v1078
    %v1080 = vpop.f32.mrf.mxu0
    %v1081 = vpop.f32.mrf.mxu0
    %v1082 = vpop.f32.mrf.mxu0
    %1083 = vdwg.mxu0
    %v1084 = vadd.f32 %v530, %v1079
    %v1085 = vxor.u32 %v1084, 2147483648
    %v1086 = vmul.f32 %v1085, 1.442695
    %v1087 = vpow.pop %v1086
    %v1088 = vadd.f32 %v1087, 1.0
    %v1089 = vrcp.pop %v1088
    %v1090 = vmul.f32 1.0, %v1089
    %v1091 = vtanh.pop %v1084
    %v1092 = vsel %vm35, %v1091, %v1090
    %v1093 = vmul.f32 %v1092, %v1030
    %1095 = vrot.lane.b32.xlu0 %v1092, 64
    %v1096 = vpop.permute.xlu0 %1095
    %v1098 = vmul.f32 %v1092, %v1096
    %1100 = vrot.lane.b32.xlu0 %v1098, 32
    %v1101 = vpop.permute.xlu0 %1100
    %v1103 = vadd.f32 %v1093, %v1101
    %v1104 = vtanh.pop %v1103
    %1106 = vrot.lane.b32.xlu0 %v1104, 64
    %v1107 = vpop.permute.xlu0 %1106
    %v1109 = vmul.f32 %v1092, %v1107
    %v1110 = vpack.c.bf16 %v1109, %v1109
    %1112 = vrot.lane.b32.xlu0 %v1110, 32
    %v1113 = vpop.permute.xlu0 %1112
    %v1115 = vsel %vm155, %v1113, 0
    %1117 = vmatprep.subr.bf16.mxu0 0
    %1118 = vmatpush1.bf16.msra.mxu0 0
    %1119 = vmatprep.subr.bf16.mxu0 0
    %1120 = vmatpush1.bf16.msra.mxu0 0
    %1121 = vmatprep.subr.bf16.mxu0 0
    %1122 = vmatpush1.bf16.msra.mxu0 0
    %1123 = vmatprep.subr.bf16.mxu0 0
    %1124 = vmatpush1.bf16.msra.mxu0 0
    %1125 = vmatprep.subr.bf16.mxu0 0
    %1126 = vmatpush1.bf16.msra.mxu0 0
    %1127 = vmatprep.subr.bf16.mxu0 0
    %1128 = vmatpush1.bf16.msra.mxu0 0
    %1129 = vmatprep.subr.bf16.mxu0 0
    %1130 = vmatpush1.bf16.msra.mxu0 %v819
    %1131 = vmatprep.subr.bf16.mxu0 0
    %1132 = vmatpush1.bf16.msra.mxu0 %v818
    %1133 = vmatprep.subr.bf16.mxu0 0
    %1134 = vmatpush2.bf16.msra.mxu0 0
    %1135 = vmatprep.subr.bf16.mxu0 0
    %1136 = vmatpush2.bf16.msra.mxu0 0
    %1137 = vmatprep.subr.bf16.mxu0 0
    %1138 = vmatpush2.bf16.msra.mxu0 0
    %1139 = vmatprep.subr.bf16.mxu0 0
    %1140 = vmatpush2.bf16.msra.mxu0 0
    %1141 = vmatprep.subr.bf16.mxu0 0
    %1142 = vmatpush2.bf16.msra.mxu0 0
    %1143 = vmatprep.subr.bf16.mxu0 0
    %1144 = vmatpush2.bf16.msra.mxu0 0
    %1145 = vmatprep.subr.bf16.mxu0 0
    %1146 = vmatpush2.bf16.msra.mxu0 0
    %1147 = vmatprep.subr.bf16.mxu0 0
    %1148 = vmatpush2.bf16.msra.mxu0 0
    %1149 = vmatprep.mubr.bf16.mxu0 0
    %1150 = vmatmul.mubr.bf16.gmra.mxu0 %v1115
    %v1151 = vpop.f32.mrf.mxu0
    %v1152 = vadd.f32 0.0, %v1151
    %v1153 = vpop.f32.mrf.mxu0
    %v1154 = vpop.f32.mrf.mxu0
    %v1155 = vpop.f32.mrf.mxu0
    %1156 = vdwg.mxu0
    %v1157 = vadd.f32 %v612, %v1152
    %v1158 = vxor.u32 %v1157, 2147483648
    %v1159 = vmul.f32 %v1158, 1.442695
    %v1160 = vpow.pop %v1159
    %v1161 = vadd.f32 %v1160, 1.0
    %v1162 = vrcp.pop %v1161
    %v1163 = vmul.f32 1.0, %v1162
    %v1164 = vtanh.pop %v1157
    %v1165 = vsel %vm35, %v1164, %v1163
    %v1166 = vmul.f32 %v1165, %v1103
    %1168 = vrot.lane.b32.xlu0 %v1165, 64
    %v1169 = vpop.permute.xlu0 %1168
    %v1171 = vmul.f32 %v1165, %v1169
    %1173 = vrot.lane.b32.xlu0 %v1171, 32
    %v1174 = vpop.permute.xlu0 %1173
    %v1176 = vadd.f32 %v1166, %v1174
    %v1177 = vtanh.pop %v1176
    %1179 = vrot.lane.b32.xlu0 %v1177, 64
    %v1180 = vpop.permute.xlu0 %1179
    %v1182 = vmul.f32 %v1165, %v1180
    %v1183 = vpack.c.bf16 %v1182, %v1182
    %1185 = vrot.lane.b32.xlu0 %v1183, 32
    %v1186 = vpop.permute.xlu0 %1185
    %v1188 = vsel %vm155, %v1186, 0
    %1190 = vmatprep.subr.bf16.mxu0 0
    %1191 = vmatpush1.bf16.msra.mxu0 0
    %1192 = vmatprep.subr.bf16.mxu0 0
    %1193 = vmatpush1.bf16.msra.mxu0 0
    %1194 = vmatprep.subr.bf16.mxu0 0
    %1195 = vmatpush1.bf16.msra.mxu0 0
    %1196 = vmatprep.subr.bf16.mxu0 0
    %1197 = vmatpush1.bf16.msra.mxu0 0
    %1198 = vmatprep.subr.bf16.mxu0 0
    %1199 = vmatpush1.bf16.msra.mxu0 0
    %1200 = vmatprep.subr.bf16.mxu0 0
    %1201 = vmatpush1.bf16.msra.mxu0 0
    %1202 = vmatprep.subr.bf16.mxu0 0
    %1203 = vmatpush1.bf16.msra.mxu0 %v819
    %1204 = vmatprep.subr.bf16.mxu0 0
    %1205 = vmatpush1.bf16.msra.mxu0 %v818
    %1206 = vmatprep.subr.bf16.mxu0 0
    %1207 = vmatpush2.bf16.msra.mxu0 0
    %1208 = vmatprep.subr.bf16.mxu0 0
    %1209 = vmatpush2.bf16.msra.mxu0 0
    %1210 = vmatprep.subr.bf16.mxu0 0
    %1211 = vmatpush2.bf16.msra.mxu0 0
    %1212 = vmatprep.subr.bf16.mxu0 0
    %1213 = vmatpush2.bf16.msra.mxu0 0
    %1214 = vmatprep.subr.bf16.mxu0 0
    %1215 = vmatpush2.bf16.msra.mxu0 0
    %1216 = vmatprep.subr.bf16.mxu0 0
    %1217 = vmatpush2.bf16.msra.mxu0 0
    %1218 = vmatprep.subr.bf16.mxu0 0
    %1219 = vmatpush2.bf16.msra.mxu0 0
    %1220 = vmatprep.subr.bf16.mxu0 0
    %1221 = vmatpush2.bf16.msra.mxu0 0
    %1222 = vmatprep.mubr.bf16.mxu0 0
    %1223 = vmatmul.mubr.bf16.gmra.mxu0 %v1188
    %v1224 = vpop.f32.mrf.mxu0
    %v1225 = vadd.f32 0.0, %v1224
    %v1226 = vpop.f32.mrf.mxu0
    %v1227 = vpop.f32.mrf.mxu0
    %v1228 = vpop.f32.mrf.mxu0
    %1229 = vdwg.mxu0
    %v1230 = vadd.f32 %v694, %v1225
    %v1231 = vxor.u32 %v1230, 2147483648
    %v1232 = vmul.f32 %v1231, 1.442695
    %v1233 = vpow.pop %v1232
    %v1234 = vadd.f32 %v1233, 1.0
    %v1235 = vrcp.pop %v1234
    %v1236 = vmul.f32 1.0, %v1235
    %v1237 = vtanh.pop %v1230
    %v1238 = vsel %vm35, %v1237, %v1236
    %v1239 = vmul.f32 %v1238, %v1176
    %1241 = vrot.lane.b32.xlu0 %v1238, 64
    %v1242 = vpop.permute.xlu0 %1241
    %v1244 = vmul.f32 %v1238, %v1242
    %1246 = vrot.lane.b32.xlu0 %v1244, 32
    %v1247 = vpop.permute.xlu0 %1246
    %v1249 = vadd.f32 %v1239, %v1247
    %v1250 = vtanh.pop %v1249
    %1252 = vrot.lane.b32.xlu0 %v1250, 64
    %v1253 = vpop.permute.xlu0 %1252
    %v1255 = vmul.f32 %v1238, %v1253
    %v1256 = vpack.c.bf16 %v1255, %v1255
    %1258 = vrot.lane.b32.xlu0 %v1256, 32
    %v1259 = vpop.permute.xlu0 %1258
    %v1261 = vsel %vm155, %v1259, 0
    %1263 = vmatprep.subr.bf16.mxu0 0
    %1264 = vmatpush1.bf16.msra.mxu0 0
    %1265 = vmatprep.subr.bf16.mxu0 0
    %1266 = vmatpush1.bf16.msra.mxu0 0
    %1267 = vmatprep.subr.bf16.mxu0 0
    %1268 = vmatpush1.bf16.msra.mxu0 0
    %1269 = vmatprep.subr.bf16.mxu0 0
    %1270 = vmatpush1.bf16.msra.mxu0 0
    %1271 = vmatprep.subr.bf16.mxu0 0
    %1272 = vmatpush1.bf16.msra.mxu0 0
    %1273 = vmatprep.subr.bf16.mxu0 0
    %1274 = vmatpush1.bf16.msra.mxu0 0
    %1275 = vmatprep.subr.bf16.mxu0 0
    %1276 = vmatpush1.bf16.msra.mxu0 %v819
    %1277 = vmatprep.subr.bf16.mxu0 0
    %1278 = vmatpush1.bf16.msra.mxu0 %v818
    %1279 = vmatprep.subr.bf16.mxu0 0
    %1280 = vmatpush2.bf16.msra.mxu0 0
    %1281 = vmatprep.subr.bf16.mxu0 0
    %1282 = vmatpush2.bf16.msra.mxu0 0
    %1283 = vmatprep.subr.bf16.mxu0 0
    %1284 = vmatpush2.bf16.msra.mxu0 0
    %1285 = vmatprep.subr.bf16.mxu0 0
    %1286 = vmatpush2.bf16.msra.mxu0 0
    %1287 = vmatprep.subr.bf16.mxu0 0
    %1288 = vmatpush2.bf16.msra.mxu0 0
    %1289 = vmatprep.subr.bf16.mxu0 0
    %1290 = vmatpush2.bf16.msra.mxu0 0
    %1291 = vmatprep.subr.bf16.mxu0 0
    %1292 = vmatpush2.bf16.msra.mxu0 0
    %1293 = vmatprep.subr.bf16.mxu0 0
    %1294 = vmatpush2.bf16.msra.mxu0 0
    %1295 = vmatprep.mubr.bf16.mxu0 0
    %1296 = vmatmul.mubr.bf16.gmra.mxu0 %v1261
    %v1297 = vpop.f32.mrf.mxu0
    %v1298 = vadd.f32 0.0, %v1297
    %v1299 = vpop.f32.mrf.mxu0
    %v1300 = vpop.f32.mrf.mxu0
    %v1301 = vpop.f32.mrf.mxu0
    %1302 = vdwg.mxu0
    %v1303 = vadd.f32 %v775, %v1298
    %v1304 = vxor.u32 %v1303, 2147483648
    %v1305 = vmul.f32 %v1304, 1.442695
    %v1306 = vpow.pop %v1305
    %v1307 = vadd.f32 %v1306, 1.0
    %v1308 = vrcp.pop %v1307
    %v1309 = vmul.f32 1.0, %v1308
    %v1310 = vtanh.pop %v1303
    %v1311 = vsel %vm35, %v1310, %v1309
    %v1312 = vmul.f32 %v1311, %v1249
    %1314 = vrot.lane.b32.xlu0 %v1311, 64
    %v1315 = vpop.permute.xlu0 %1314
    %v1317 = vmul.f32 %v1311, %v1315
    %1319 = vrot.lane.b32.xlu0 %v1317, 32
    %v1320 = vpop.permute.xlu0 %1319
    %v1322 = vadd.f32 %v1312, %v1320
    %v1323 = vtanh.pop %v1322
    %1325 = vrot.lane.b32.xlu0 %v1323, 64
    %v1326 = vpop.permute.xlu0 %1325
    %v1328 = vmul.f32 %v1311, %v1326
    %v1329 = vpack.c.bf16 %v1328, %v1328
    %v1330 = vld [vmem:[%s6] sm:$0xf]
    %v1331 = vld [vmem:[%s6 + $0x4] sm:$0xf]
    %v1332 = vld [vmem:[%s6 + $0x8] sm:$0xf]
    %v1333 = vld [vmem:[%s6 + $0xc] sm:$0xf]
    %v1334 = vld [vmem:[%s7] sm:$0x1]
    %v1336 = vlaneseq
    %v1337 = vshrl.u32 %v1336, 7
    %v1338 = vsub.s32 0, %v1337
    %v1339 = vrot.slane %v1334, %v1338
    %1342 = vrot.lane.b32.xlu0 %v1329, 32
    %v1343 = vpop.permute.xlu0 %1342
    %v1348 = vunpack.c.l.b16 %v1330
    %v1349 = vunpack.c.l.b16 %v1331
    %v1350 = vunpack.c.l.b16 %v1332
    %v1351 = vunpack.c.l.b16 %v1333
    %v1352 = vpack.c.b16 %v1349, %v1348
    %v1353 = vpack.c.b16 %v1351, %v1350
    %v1357 = vsel %vm155, %v1343, 0
    %1359 = vmatprep.subr.bf16.mxu0 0
    %1360 = vmatpush1.bf16.msra.mxu0 0
    %1361 = vmatprep.subr.bf16.mxu0 0
    %1362 = vmatpush1.bf16.msra.mxu0 0
    %1363 = vmatprep.subr.bf16.mxu0 0
    %1364 = vmatpush1.bf16.msra.mxu0 0
    %1365 = vmatprep.subr.bf16.mxu0 0
    %1366 = vmatpush1.bf16.msra.mxu0 0
    %1367 = vmatprep.subr.bf16.mxu0 0
    %1368 = vmatpush1.bf16.msra.mxu0 0
    %1369 = vmatprep.subr.bf16.mxu0 0
    %1370 = vmatpush1.bf16.msra.mxu0 0
    %1371 = vmatprep.subr.bf16.mxu0 0
    %1372 = vmatpush1.bf16.msra.mxu0 %v1353
    %1373 = vmatprep.subr.bf16.mxu0 0
    %1374 = vmatpush1.bf16.msra.mxu0 %v1352
    %1375 = vmatprep.subr.bf16.mxu0 0
    %1376 = vmatpush2.bf16.msra.mxu0 0
    %1377 = vmatprep.subr.bf16.mxu0 0
    %1378 = vmatpush2.bf16.msra.mxu0 0
    %1379 = vmatprep.subr.bf16.mxu0 0
    %1380 = vmatpush2.bf16.msra.mxu0 0
    %1381 = vmatprep.subr.bf16.mxu0 0
    %1382 = vmatpush2.bf16.msra.mxu0 0
    %1383 = vmatprep.subr.bf16.mxu0 0
    %1384 = vmatpush2.bf16.msra.mxu0 0
    %1385 = vmatprep.subr.bf16.mxu0 0
    %1386 = vmatpush2.bf16.msra.mxu0 0
    %1387 = vmatprep.subr.bf16.mxu0 0
    %1388 = vmatpush2.bf16.msra.mxu0 0
    %1389 = vmatprep.subr.bf16.mxu0 0
    %1390 = vmatpush2.bf16.msra.mxu0 0
    %1391 = vmatprep.mubr.bf16.mxu0 0
    %1392 = vmatmul.mubr.bf16.gmra.mxu0 %v1357
    %v1393 = vpop.f32.mrf.mxu0
    %v1394 = vadd.f32 %v1339, %v1393
    %v1395 = vpop.f32.mrf.mxu0
    %v1396 = vpop.f32.mrf.mxu0
    %v1397 = vpop.f32.mrf.mxu0
    %1398 = vdwg.mxu0
    %vm1399 = vcmask 25600
    %1400 = vst.msk [vmem:[#allocation2] sm:$0x3] %vm1399, %v1394
    // Predicated region
    $region34: #{lstm_anomaly_detector_forward.1} parent=1 // pred_check
      _
    $region35: #{lstm_anomaly_detector_forward.1} parent=1 // pred_check_branch
      %1402 = sbr.rel (0) target = $region37
    $region36: #{lstm_anomaly_detector_forward.1} parent=1 // pred_region
      %s1404 = ssub.s32 32, 32
      %1405 = vsyncadd [#allocation3], %s1404
      %s1407 = sshll.u32 [#allocation2], 4
      %s1408 = int_to_ptr.vmem [resolvable:$true] %s1407
      %1410 = dma.vmem_to_hbm [thread:$0]  %s1408, 32, %s8, [#allocation3]
    $region37: #{lstm_anomaly_detector_forward.1} parent=1 // pred_fallthru
      _
    // Predicated region
    $region38: #{lstm_anomaly_detector_forward.1} parent=1 // pred_check
      _
    $region39: #{lstm_anomaly_detector_forward.1} parent=1 // pred_check_branch
      %1412 = sbr.rel (0) target = $region41
    $region40: #{lstm_anomaly_detector_forward.1} parent=1 // pred_region
      %1413 = dma.done [#allocation3], 32
    $region41: #{lstm_anomaly_detector_forward.1} parent=1 // pred_fallthru
      _
    %1414 = vsyncpa [#allocation3], 1

</llo_original>
